<compile_context>
chip_gen: v7x
topology: tpu7x:2x2x1
jax: 0.10.0
libtpu: 0.0.40
codegen_flags: <defaults>
</compile_context>

<pallas_src>
import jax
import jax.numpy as jnp
from jax import lax
from jax.experimental import pallas as pl
from jax.experimental.pallas import tpu as pltpu


# ------------------------------ fused kernel ------------------------------- #

def _fused_cnn_kernel(a_ref, m1_ref, b1_ref, m2_ref, b2_ref,
                      wp_ref, pmask_ref, fold_ref, sel_ref, bp_ref, o_ref):
    """conv1+ReLU -> conv2+ReLU -> flatten -> linear, all resident in VMEM.

    a_ref     : (B*H, W*Cin)        input, rows ordered (h, b), lanes (w, ci)
    m1/m2_ref : (W*Cin, 3*W*Cout)   banded conv weights, kh taps concat on lanes
    b1/b2_ref : (1, W*Cout)         conv bias tiled over w (per-lane), f32
    wp_ref    : (W*C2, H*O)         projection weight, per-image-row blocks on lanes
    pmask_ref : (B*H, H*O)          0/1 block-diagonal mask (h of row == h of lane)
    fold_ref  : (H*O, O)            tiled identity (lane fold)
    sel_ref   : (B, B*H)            batch-select / h-sum matrix
    bp_ref    : (1, O)              projection bias, f32
    o_ref     : (B, O)              output, f32
    """
    B, O = o_ref.shape
    n = a_ref.shape[0]                 # B*H
    mm = m1_ref.dtype                  # matmul operand dtype (bf16)

    def conv_relu(act, m_ref, brow_ref):
        # One MXU matmul for all three kh taps; kw taps + W zero-padding live
        # inside the banded matrix.  kh=0/2 need the image row above/below:
        # (shift @ act) @ m == roll(act @ m)  -> do the shift on the XLU and
        # zero the wrapped rows (h==0 for the up tap, h==H-1 for the down tap).
        wc = brow_ref.shape[-1]
        t = jnp.dot(act.astype(mm), m_ref[...],
                    preferred_element_type=jnp.float32)        # (n, 3*wc)
        t0 = t[:, :wc]                                          # kh = 0 tap
        t1 = t[:, wc:2 * wc]                                    # kh = 1 tap
        t2 = t[:, 2 * wc:]                                      # kh = 2 tap
        row = lax.broadcasted_iota(jnp.int32, (n, wc), 0)
        up = jnp.where(row >= B, pltpu.roll(t0, shift=B, axis=0), 0.0)
        dn = jnp.where(row < n - B, pltpu.roll(t2, shift=n - B, axis=0), 0.0)
        return jnp.maximum(up + t1 + dn + brow_ref[...], 0.0)

    h1 = conv_relu(a_ref[...], m1_ref, b1_ref)    # (B*H, W*C1)  lane-dense
    h2 = conv_relu(h1, m2_ref, b2_ref)            # (B*H, W*C2)  lane-dense

    # Projection: one lane-dense matmul against all H row-blocks at once,
    # then a block-diagonal fold (mask * P, lane fold, batch select).
    p = jnp.dot(h2.astype(mm), wp_ref[...],
                preferred_element_type=jnp.float32)             # (B*H, H*O)
    pm = p * pmask_ref[...]                                     # keep h'==h
    q = jnp.dot(pm.astype(mm), fold_ref[...],
                preferred_element_type=jnp.float32)             # (B*H, O)
    out = jnp.dot(sel_ref[...], q.astype(mm),
                  preferred_element_type=jnp.float32)           # (B, O)
    o_ref[...] = out + bp_ref[...]


# ------------------------- one-off parameter repack ------------------------ #

def _band_conv_weight(w, W):
    """(3, 3, Cin, Cout) conv kernel -> (3, W*Cin, W*Cout) banded matrices.

    m[kh, wi*Cin + ci, wo*Cout + co] = w[kh, wi - wo + 1, ci, co]; the band
    structure implements both the kw taps and the zero padding along W.
    """
    kh_n, kw_n, cin, cout = w.shape
    m = jnp.zeros((kh_n, W * cin, W * cout), w.dtype)
    for wo in range(W):
        for kw in range(kw_n):
            wi = wo + kw - 1
            if 0 <= wi < W:
                m = m.at[:, wi * cin:(wi + 1) * cin,
                         wo * cout:(wo + 1) * cout].set(w[:, kw])
    return m


def prepare_params(params, H, W, mm_dtype=jnp.bfloat16):
    """One-off (outside the hot path) repack of the torch-style parameters."""
    w1, b1, w2, b2, wp, bp = params
    c2 = w2.shape[3]
    o = wp.shape[1]

    m1 = _band_conv_weight(w1, W)                 # (3, W*Cin, W*C1)
    m2 = _band_conv_weight(w2, W)                 # (3, W*C1,  W*C2)
    # Concatenate the kh taps along the output (lane) axis -> one matmul/conv.
    m1_cat = jnp.concatenate([m1[0], m1[1], m1[2]], axis=1).astype(mm_dtype)
    m2_cat = jnp.concatenate([m2[0], m2[1], m2[2]], axis=1).astype(mm_dtype)
    b1row = jnp.tile(b1, W)[None, :].astype(jnp.float32)
    b2row = jnp.tile(b2, W)[None, :].astype(jnp.float32)

    # Linear weight: permute rows from the torch NCHW-flatten order (c, h, w)
    # to the kernel's (h, w, c) order, then concatenate the per-image-row
    # blocks along lanes: (W*C2, H*O) -- lane-dense, no in-kernel transpose.
    flat = jnp.arange(H * W * c2)
    h_i = flat // (W * c2)
    w_i = (flat % (W * c2)) // c2
    c_i = flat % c2
    wp_perm = wp[c_i * (H * W) + h_i * W + w_i].reshape(H, W * c2, o)
    wp_cat = jnp.transpose(wp_perm, (1, 0, 2)).reshape(W * c2, H * o)
    wp_cat = wp_cat.astype(mm_dtype)

    return (m1_cat, b1row, m2_cat, b2row, wp_cat, bp[None, :].astype(jnp.float32))


# --------------------------------- wrapper --------------------------------- #

@jax.jit
def cnn_forward(x_nchw, prepared):
    """Forward pass matching CNN.forward: proj(cnn(input)).  x: (B, Cin, H, W)."""
    m1c, b1row, m2c, b2row, wp_cat, bp_row = prepared
    B, Cin, H, W = x_nchw.shape
    C1 = b1row.shape[1] // W
    C2 = b2row.shape[1] // W
    O = bp_row.shape[1]
    n = B * H
    mm_dtype = m1c.dtype

    # (B, Cin, H, W) -> rows (h, b), lanes (w, ci).  Tiny one-off relayout.
    a = jnp.transpose(x_nchw, (2, 0, 3, 1)).reshape(n, W * Cin)

    # Projection fold constants (pure functions of B, H, O -> constant-folded).
    r = jnp.arange(n)
    lane = jnp.arange(H * O)
    pmask = ((r[:, None] // B) == (lane[None, :] // O)).astype(jnp.float32)
    fold = jnp.tile(jnp.eye(O, dtype=jnp.float32), (H, 1)).astype(mm_dtype)
    sel = (r[None, :] % B == jnp.arange(B)[:, None]).astype(mm_dtype)

    return pl.pallas_call(
        _fused_cnn_kernel,
        out_shape=jax.ShapeDtypeStruct((B, O), jnp.float32),
        grid_spec=pltpu.PrefetchScalarGridSpec(
            num_scalar_prefetch=0,
            grid=(1,),
            in_specs=[
                pl.BlockSpec((n, W * Cin), lambda i: (0, 0)),
                pl.BlockSpec((W * Cin, 3 * W * C1), lambda i: (0, 0)),
                pl.BlockSpec((1, W * C1), lambda i: (0, 0)),
                pl.BlockSpec((W * C1, 3 * W * C2), lambda i: (0, 0)),
                pl.BlockSpec((1, W * C2), lambda i: (0, 0)),
                pl.BlockSpec((W * C2, H * O), lambda i: (0, 0)),
                pl.BlockSpec((n, H * O), lambda i: (0, 0)),
                pl.BlockSpec((H * O, O), lambda i: (0, 0)),
                pl.BlockSpec((B, n), lambda i: (0, 0)),
                pl.BlockSpec((1, O), lambda i: (0, 0)),
            ],
            out_specs=pl.BlockSpec((B, O), lambda i: (0, 0)),
        ),
        compiler_params=pltpu.CompilerParams(
            dimension_semantics=("arbitrary",)),
    )(a, m1c, b1row, m2c, b2row, wp_cat, pmask, fold, sel, bp_row)


# ----------------------- reference / params / driver ----------------------- #

def init_params(key, cin, hidden_c, h, w, model_outsize):
    k1, k2, k3, k4, k5, k6 = jax.random.split(key, 6)
    w1 = jax.random.normal(k1, (3, 3, cin, hidden_c), jnp.float32) * 0.1
    b1 = jax.random.normal(k2, (hidden_c,), jnp.float32) * 0.01
    w2 = jax.random.normal(k3, (3, 3, hidden_c, hidden_c), jnp.float32) * 0.1
    b2 = jax.random.normal(k4, (hidden_c,), jnp.float32) * 0.01
    feat = hidden_c * h * w
    wp = jax.random.normal(k5, (feat, model_outsize), jnp.float32) * 0.02
    bp = jax.random.normal(k6, (model_outsize,), jnp.float32) * 0.01
    return (w1, b1, w2, b2, wp, bp)


def reference_forward(x_nchw, params):
    """Pure-JAX reference with the exact semantics of the torch module."""
    w1, b1, w2, b2, wp, bp = params
    x = jnp.transpose(x_nchw, (0, 2, 3, 1))          # NHWC

    def conv(z, w, b):
        y = lax.conv_general_dilated(
            z, w, window_strides=(1, 1), padding="SAME",
            dimension_numbers=("NHWC", "HWIO", "NHWC"),
            precision=lax.Precision.HIGHEST)
        return jnp.maximum(y + b, 0.0)

    h1 = conv(x, w1, b1)
    h2 = conv(h1, w2, b2)
    feat = jnp.transpose(h2, (0, 3, 1, 2)).reshape(x.shape[0], -1)  # NCHW flatten
    return jnp.dot(feat, wp, precision=lax.Precision.HIGHEST) + bp


def repack_emulation_forward(x_nchw, prepared_f32):
    """Pure-JAX (f32, HIGHEST) emulation of the kernel's repacked algorithm.

    Validates the banded-weight / row-permutation / roll-mask / fold logic at
    tight tolerance, independently of MXU matmul precision.
    """
    m1c, b1row, m2c, b2row, wp_cat, bp_row = prepared_f32
    B, Cin, H, W = x_nchw.shape
    O = bp_row.shape[1]
    n = B * H
    a = jnp.transpose(x_nchw, (2, 0, 3, 1)).reshape(n, W * Cin)

    def conv_relu(act, mc, brow):
        wc = brow.shape[-1]
        t = jnp.dot(act, mc, precision=lax.Precision.HIGHEST)
        row = jnp.arange(n)[:, None]
        up = jnp.where(row >= B, jnp.roll(t[:, :wc], B, axis=0), 0.0)
        dn = jnp.where(row < n - B, jnp.roll(t[:, 2 * wc:], -B, axis=0), 0.0)
        return jnp.maximum(up + t[:, wc:2 * wc] + dn + brow, 0.0)

    h2 = conv_relu(conv_relu(a, m1c, b1row), m2c, b2row)
    p = jnp.dot(h2, wp_cat, precision=lax.Precision.HIGHEST)
    r = jnp.arange(n)
    lane = jnp.arange(H * O)
    pmask = ((r[:, None] // B) == (lane[None, :] // O)).astype(jnp.float32)
    fold = jnp.tile(jnp.eye(O, dtype=jnp.float32), (H, 1))
    sel = (r[None, :] % B == jnp.arange(B)[:, None]).astype(jnp.float32)
    q = jnp.dot(p * pmask, fold, precision=lax.Precision.HIGHEST)
    return jnp.dot(sel, q, precision=lax.Precision.HIGHEST) + bp_row


if __name__ == "__main__":
    B, Cin, H, W = 2, 4, 16, 16           # config.input_shape = (4, 16, 16)
    hidden_c = 8
    model_outsize = 32

    key = jax.random.PRNGKey(0)
    kx, kp = jax.random.split(key)
    x = jax.random.normal(kx, (B, Cin, H, W), jnp.float32)
    params = init_params(kp, Cin, hidden_c, H, W, model_outsize)

    ref = reference_forward(x, params)

    # Tight check of the repack/roll/fold algorithm itself (f32, host/XLA).
    prepared_f32 = prepare_params(params, H, W, mm_dtype=jnp.float32)
    emu = repack_emulation_forward(x, prepared_f32)
    assert bool(jnp.allclose(emu, ref, rtol=1e-4, atol=1e-4)), (
        float(jnp.max(jnp.abs(emu - ref))))

    # Pallas kernel with bf16 matmul operands + f32 accumulation; tolerance
    # sized for bf16 operands (f32 accumulate keeps the error ~1e-2).
    prepared = prepare_params(params, H, W, mm_dtype=jnp.bfloat16)
    out = cnn_forward(x, prepared)
    jax.block_until_ready(out)
    assert out.shape == (B, model_outsize), out.shape
    assert bool(jnp.allclose(out, ref, rtol=2e-2, atol=2e-2)), (
        float(jnp.max(jnp.abs(out - ref))))
    print("KERNEL_OK")
</pallas_src>

<mosaic_0001>
module attributes {stable_mosaic.version = 11 : i64} {
  func.func @_fused_cnn_kernel(%arg0: i32, %arg1: memref<32x64xf32, #tpu.memory_space<vmem>>, %arg2: memref<64x384xbf16, #tpu.memory_space<vmem>>, %arg3: memref<1x128xf32, #tpu.memory_space<vmem>>, %arg4: memref<128x384xbf16, #tpu.memory_space<vmem>>, %arg5: memref<1x128xf32, #tpu.memory_space<vmem>>, %arg6: memref<128x512xbf16, #tpu.memory_space<vmem>>, %arg7: memref<32x512xf32, #tpu.memory_space<vmem>>, %arg8: memref<512x32xbf16, #tpu.memory_space<vmem>>, %arg9: memref<2x32xbf16, #tpu.memory_space<vmem>>, %arg10: memref<1x32xf32, #tpu.memory_space<vmem>>, %arg11: memref<2x32xf32, #tpu.memory_space<vmem>>) attributes {dimension_semantics = [#tpu.dimension_semantics<arbitrary>], iteration_bounds = array<i64: 1>, scalar_prefetch = 0 : i64, scratch_operands = 0 : i64, tpu.core_type = #tpu.core_type<tc>, window_params = [{pipeline_mode = #tpu.pipeline_mode<synchronous>, transform_indices = @transform_0, window_bounds = array<i64: 32, 64>}, {pipeline_mode = #tpu.pipeline_mode<synchronous>, transform_indices = @transform_1, window_bounds = array<i64: 64, 384>}, {pipeline_mode = #tpu.pipeline_mode<synchronous>, transform_indices = @transform_2, window_bounds = array<i64: 1, 128>}, {pipeline_mode = #tpu.pipeline_mode<synchronous>, transform_indices = @transform_3, window_bounds = array<i64: 128, 384>}, {pipeline_mode = #tpu.pipeline_mode<synchronous>, transform_indices = @transform_4, window_bounds = array<i64: 1, 128>}, {pipeline_mode = #tpu.pipeline_mode<synchronous>, transform_indices = @transform_5, window_bounds = array<i64: 128, 512>}, {pipeline_mode = #tpu.pipeline_mode<synchronous>, transform_indices = @transform_6, window_bounds = array<i64: 32, 512>}, {pipeline_mode = #tpu.pipeline_mode<synchronous>, transform_indices = @transform_7, window_bounds = array<i64: 512, 32>}, {pipeline_mode = #tpu.pipeline_mode<synchronous>, transform_indices = @transform_8, window_bounds = array<i64: 2, 32>}, {pipeline_mode = #tpu.pipeline_mode<synchronous>, transform_indices = @transform_9, window_bounds = array<i64: 1, 32>}, {pipeline_mode = #tpu.pipeline_mode<synchronous>, transform_indices = @transform_10, window_bounds = array<i64: 2, 32>}]} {
    %c0 = arith.constant 0 : index
    %c0_0 = arith.constant 0 : index
    %0 = vector.load %arg1[%c0, %c0_0] : memref<32x64xf32, #tpu.memory_space<vmem>>, vector<32x64xf32>
    %1 = arith.truncf %0 : vector<32x64xf32> to vector<32x64xbf16>
    %c0_1 = arith.constant 0 : index
    %c0_2 = arith.constant 0 : index
    %2 = vector.load %arg2[%c0_1, %c0_2] : memref<64x384xbf16, #tpu.memory_space<vmem>>, vector<64x384xbf16>
    %cst = arith.constant dense<0.000000e+00> : vector<32x384xf32>
    %3 = tpu.matmul %1, %2, %cst {dimension_numbers = #tpu.dot_dimension_numbers<[1], [0], [0], [1], [0, 0, 1, 1], [], []>} : vector<32x64xbf16>, vector<64x384xbf16>, vector<32x384xf32> -> vector<32x384xf32>
    %4 = vector.extract_strided_slice %3 {offsets = [0, 0], sizes = [32, 128], strides = [1, 1]} : vector<32x384xf32> to vector<32x128xf32>
    %5 = vector.extract_strided_slice %3 {offsets = [0, 128], sizes = [32, 128], strides = [1, 1]} : vector<32x384xf32> to vector<32x128xf32>
    %6 = vector.extract_strided_slice %3 {offsets = [0, 256], sizes = [32, 128], strides = [1, 1]} : vector<32x384xf32> to vector<32x128xf32>
    %7 = tpu.iota {dimensions = array<i32: 0>} : vector<32x128xi32>
    %c2_i32 = arith.constant 2 : i32
    %8 = vector.broadcast %c2_i32 : i32 to vector<32x128xi32>
    %9 = arith.cmpi sge, %7, %8 : vector<32x128xi32>
    %c2_i32_3 = arith.constant 2 : i32
    %10 = tpu.dynamic_rotate %4 by %c2_i32_3 dim 0 : vector<32x128xf32>, i32 -> vector<32x128xf32>
    %cst_4 = arith.constant 0.000000e+00 : f32
    %11 = vector.broadcast %cst_4 : f32 to vector<32x128xf32>
    %12 = arith.select %9, %10, %11 : vector<32x128xi1>, vector<32x128xf32>
    %c30_i32 = arith.constant 30 : i32
    %13 = vector.broadcast %c30_i32 : i32 to vector<32x128xi32>
    %14 = arith.cmpi slt, %7, %13 : vector<32x128xi32>
    %c30_i32_5 = arith.constant 30 : i32
    %15 = tpu.dynamic_rotate %6 by %c30_i32_5 dim 0 : vector<32x128xf32>, i32 -> vector<32x128xf32>
    %cst_6 = arith.constant 0.000000e+00 : f32
    %16 = vector.broadcast %cst_6 : f32 to vector<32x128xf32>
    %17 = arith.select %14, %15, %16 : vector<32x128xi1>, vector<32x128xf32>
    %18 = arith.addf %12, %5 : vector<32x128xf32>
    %19 = arith.addf %18, %17 : vector<32x128xf32>
    %c0_7 = arith.constant 0 : index
    %c0_8 = arith.constant 0 : index
    %20 = vector.load %arg3[%c0_7, %c0_8] : memref<1x128xf32, #tpu.memory_space<vmem>>, vector<1x128xf32>
    %21 = vector.broadcast %20 : vector<1x128xf32> to vector<32x128xf32>
    %22 = arith.addf %19, %21 : vector<32x128xf32>
    %cst_9 = arith.constant 0.000000e+00 : f32
    %23 = vector.broadcast %cst_9 : f32 to vector<32x128xf32>
    %24 = arith.maximumf %22, %23 : vector<32x128xf32>
    %25 = arith.truncf %24 : vector<32x128xf32> to vector<32x128xbf16>
    %c0_10 = arith.constant 0 : index
    %c0_11 = arith.constant 0 : index
    %26 = vector.load %arg4[%c0_10, %c0_11] : memref<128x384xbf16, #tpu.memory_space<vmem>>, vector<128x384xbf16>
    %cst_12 = arith.constant dense<0.000000e+00> : vector<32x384xf32>
    %27 = tpu.matmul %25, %26, %cst_12 {dimension_numbers = #tpu.dot_dimension_numbers<[1], [0], [0], [1], [0, 0, 1, 1], [], []>} : vector<32x128xbf16>, vector<128x384xbf16>, vector<32x384xf32> -> vector<32x384xf32>
    %28 = vector.extract_strided_slice %27 {offsets = [0, 0], sizes = [32, 128], strides = [1, 1]} : vector<32x384xf32> to vector<32x128xf32>
    %29 = vector.extract_strided_slice %27 {offsets = [0, 128], sizes = [32, 128], strides = [1, 1]} : vector<32x384xf32> to vector<32x128xf32>
    %30 = vector.extract_strided_slice %27 {offsets = [0, 256], sizes = [32, 128], strides = [1, 1]} : vector<32x384xf32> to vector<32x128xf32>
    %31 = tpu.iota {dimensions = array<i32: 0>} : vector<32x128xi32>
    %c2_i32_13 = arith.constant 2 : i32
    %32 = vector.broadcast %c2_i32_13 : i32 to vector<32x128xi32>
    %33 = arith.cmpi sge, %31, %32 : vector<32x128xi32>
    %c2_i32_14 = arith.constant 2 : i32
    %34 = tpu.dynamic_rotate %28 by %c2_i32_14 dim 0 : vector<32x128xf32>, i32 -> vector<32x128xf32>
    %cst_15 = arith.constant 0.000000e+00 : f32
    %35 = vector.broadcast %cst_15 : f32 to vector<32x128xf32>
    %36 = arith.select %33, %34, %35 : vector<32x128xi1>, vector<32x128xf32>
    %c30_i32_16 = arith.constant 30 : i32
    %37 = vector.broadcast %c30_i32_16 : i32 to vector<32x128xi32>
    %38 = arith.cmpi slt, %31, %37 : vector<32x128xi32>
    %c30_i32_17 = arith.constant 30 : i32
    %39 = tpu.dynamic_rotate %30 by %c30_i32_17 dim 0 : vector<32x128xf32>, i32 -> vector<32x128xf32>
    %cst_18 = arith.constant 0.000000e+00 : f32
    %40 = vector.broadcast %cst_18 : f32 to vector<32x128xf32>
    %41 = arith.select %38, %39, %40 : vector<32x128xi1>, vector<32x128xf32>
    %42 = arith.addf %36, %29 : vector<32x128xf32>
    %43 = arith.addf %42, %41 : vector<32x128xf32>
    %c0_19 = arith.constant 0 : index
    %c0_20 = arith.constant 0 : index
    %44 = vector.load %arg5[%c0_19, %c0_20] : memref<1x128xf32, #tpu.memory_space<vmem>>, vector<1x128xf32>
    %45 = vector.broadcast %44 : vector<1x128xf32> to vector<32x128xf32>
    %46 = arith.addf %43, %45 : vector<32x128xf32>
    %cst_21 = arith.constant 0.000000e+00 : f32
    %47 = vector.broadcast %cst_21 : f32 to vector<32x128xf32>
    %48 = arith.maximumf %46, %47 : vector<32x128xf32>
    %49 = arith.truncf %48 : vector<32x128xf32> to vector<32x128xbf16>
    %c0_22 = arith.constant 0 : index
    %c0_23 = arith.constant 0 : index
    %50 = vector.load %arg6[%c0_22, %c0_23] : memref<128x512xbf16, #tpu.memory_space<vmem>>, vector<128x512xbf16>
    %cst_24 = arith.constant dense<0.000000e+00> : vector<32x512xf32>
    %51 = tpu.matmul %49, %50, %cst_24 {dimension_numbers = #tpu.dot_dimension_numbers<[1], [0], [0], [1], [0, 0, 1, 1], [], []>} : vector<32x128xbf16>, vector<128x512xbf16>, vector<32x512xf32> -> vector<32x512xf32>
    %c0_25 = arith.constant 0 : index
    %c0_26 = arith.constant 0 : index
    %52 = vector.load %arg7[%c0_25, %c0_26] : memref<32x512xf32, #tpu.memory_space<vmem>>, vector<32x512xf32>
    %53 = arith.mulf %51, %52 : vector<32x512xf32>
    %54 = arith.truncf %53 : vector<32x512xf32> to vector<32x512xbf16>
    %c0_27 = arith.constant 0 : index
    %c0_28 = arith.constant 0 : index
    %55 = vector.load %arg8[%c0_27, %c0_28] : memref<512x32xbf16, #tpu.memory_space<vmem>>, vector<512x32xbf16>
    %cst_29 = arith.constant dense<0.000000e+00> : vector<32x32xf32>
    %56 = tpu.matmul %54, %55, %cst_29 {dimension_numbers = #tpu.dot_dimension_numbers<[1], [0], [0], [1], [0, 0, 1, 1], [], []>} : vector<32x512xbf16>, vector<512x32xbf16>, vector<32x32xf32> -> vector<32x32xf32>
    %c0_30 = arith.constant 0 : index
    %c0_31 = arith.constant 0 : index
    %57 = vector.load %arg9[%c0_30, %c0_31] : memref<2x32xbf16, #tpu.memory_space<vmem>>, vector<2x32xbf16>
    %58 = arith.truncf %56 : vector<32x32xf32> to vector<32x32xbf16>
    %cst_32 = arith.constant dense<0.000000e+00> : vector<2x32xf32>
    %59 = tpu.matmul %57, %58, %cst_32 {dimension_numbers = #tpu.dot_dimension_numbers<[1], [0], [0], [1], [0, 0, 1, 1], [], []>} : vector<2x32xbf16>, vector<32x32xbf16>, vector<2x32xf32> -> vector<2x32xf32>
    %c0_33 = arith.constant 0 : index
    %c0_34 = arith.constant 0 : index
    %60 = vector.load %arg10[%c0_33, %c0_34] : memref<1x32xf32, #tpu.memory_space<vmem>>, vector<1x32xf32>
    %61 = vector.broadcast %60 : vector<1x32xf32> to vector<2x32xf32>
    %62 = arith.addf %59, %61 : vector<2x32xf32>
    %c0_35 = arith.constant 0 : index
    %c0_36 = arith.constant 0 : index
    %63 = vector.load %arg11[%c0_35, %c0_36] : memref<2x32xf32, #tpu.memory_space<vmem>>, vector<2x32xf32>
    tpu.vector_store %arg11[%c0_35, %c0_36], %62 {strides = array<i32>} : memref<2x32xf32, #tpu.memory_space<vmem>>, vector<2x32xf32>,
    return
  }
  func.func @transform_0(%arg0: i32) -> (i32, i32) {
    %c0_i32 = arith.constant 0 : i32
    %c0_i32_0 = arith.constant 0 : i32
    %c0_i32_1 = arith.constant 0 : i32
    return %c0_i32, %c0_i32_0 : i32, i32
  }
  func.func @transform_1(%arg0: i32) -> (i32, i32) {
    %c0_i32 = arith.constant 0 : i32
    %c0_i32_0 = arith.constant 0 : i32
    %c0_i32_1 = arith.constant 0 : i32
    return %c0_i32, %c0_i32_0 : i32, i32
  }
  func.func @transform_2(%arg0: i32) -> (i32, i32) {
    %c0_i32 = arith.constant 0 : i32
    %c0_i32_0 = arith.constant 0 : i32
    %c0_i32_1 = arith.constant 0 : i32
    return %c0_i32, %c0_i32_0 : i32, i32
  }
  func.func @transform_3(%arg0: i32) -> (i32, i32) {
    %c0_i32 = arith.constant 0 : i32
    %c0_i32_0 = arith.constant 0 : i32
    %c0_i32_1 = arith.constant 0 : i32
    return %c0_i32, %c0_i32_0 : i32, i32
  }
  func.func @transform_4(%arg0: i32) -> (i32, i32) {
    %c0_i32 = arith.constant 0 : i32
    %c0_i32_0 = arith.constant 0 : i32
    %c0_i32_1 = arith.constant 0 : i32
    return %c0_i32, %c0_i32_0 : i32, i32
  }
  func.func @transform_5(%arg0: i32) -> (i32, i32) {
    %c0_i32 = arith.constant 0 : i32
    %c0_i32_0 = arith.constant 0 : i32
    %c0_i32_1 = arith.constant 0 : i32
    return %c0_i32, %c0_i32_0 : i32, i32
  }
  func.func @transform_6(%arg0: i32) -> (i32, i32) {
    %c0_i32 = arith.constant 0 : i32
    %c0_i32_0 = arith.constant 0 : i32
    %c0_i32_1 = arith.constant 0 : i32
    return %c0_i32, %c0_i32_0 : i32, i32
  }
  func.func @transform_7(%arg0: i32) -> (i32, i32) {
    %c0_i32 = arith.constant 0 : i32
    %c0_i32_0 = arith.constant 0 : i32
    %c0_i32_1 = arith.constant 0 : i32
    return %c0_i32, %c0_i32_0 : i32, i32
  }
  func.func @transform_8(%arg0: i32) -> (i32, i32) {
    %c0_i32 = arith.constant 0 : i32
    %c0_i32_0 = arith.constant 0 : i32
    %c0_i32_1 = arith.constant 0 : i32
    return %c0_i32, %c0_i32_0 : i32, i32
  }
  func.func @transform_9(%arg0: i32) -> (i32, i32) {
    %c0_i32 = arith.constant 0 : i32
    %c0_i32_0 = arith.constant 0 : i32
    %c0_i32_1 = arith.constant 0 : i32
    return %c0_i32, %c0_i32_0 : i32, i32
  }
  func.func @transform_10(%arg0: i32) -> (i32, i32) {
    %c0_i32 = arith.constant 0 : i32
    %c0_i32_0 = arith.constant 0 : i32
    %c0_i32_1 = arith.constant 0 : i32
    return %c0_i32, %c0_i32_0 : i32, i32
  }
}

</mosaic_0001>

<llo_original>
// kernel: cnn_forward.1
$region0: #{cnn_forward.1}
  #allocation0 [shape = 'u32[]', space=smem, size = 0x4, offset = 0x4, fixed_abs, tag = 'smem constant byte address 0x4 - core index']
  #allocation1 [shape = 'u32[144,128]{1,0:T(1,128)}', space=vmem, size = 0x12000, scoped, tag = 'internal scratch']
  %s0 = inlined_call_operand.vmem [shape: f32[32,64], index: 0, kind: input, shape index: {}]
  %s1 = inlined_call_operand.vmem [shape: bf16[64,384], index: 1, kind: input, shape index: {}]
  %s2 = inlined_call_operand.vmem [shape: f32[1,128], index: 2, kind: input, shape index: {}]
  %s3 = inlined_call_operand.vmem [shape: bf16[128,384], index: 3, kind: input, shape index: {}]
  %s4 = inlined_call_operand.vmem [shape: f32[1,128], index: 4, kind: input, shape index: {}]
  %s5 = inlined_call_operand.vmem [shape: bf16[128,512], index: 5, kind: input, shape index: {}]
  %s6 = inlined_call_operand.vmem [shape: f32[32,512], index: 6, kind: input, shape index: {}]
  %s7 = inlined_call_operand.vmem [shape: bf16[512,32], index: 7, kind: input, shape index: {}]
  %s8 = inlined_call_operand.vmem [shape: bf16[2,32], index: 8, kind: input, shape index: {}]
  %s9 = inlined_call_operand.vmem [shape: f32[1,32], index: 9, kind: input, shape index: {}]
  %s10 = inlined_call_operand.hbm [shape: f32[2,32], index: 10, kind: output, shape index: {}]
  %s11 = sld [smem:[#allocation0]]
  $region50: #{cnn_forward.1} parent=0
    _
  %s13 = ssub.s32 1, %s11
  %s14 = scalar_select 0, %s13, %s11
  $region1: #{cnn_forward.1} parent=0
    #allocation2 [shape = 'u8[1024]{0}', space=vmem, size = 0x400, scoped, tag = 'output window, operand 0, single buffered']
    #allocation3 [shape = 's32[1]{0}', space=sflag, size = 0x4, scoped, tag = 'scoped memory for cnn_forward.1']
    %15 = vsyncpa [#allocation3], 0
    // Predicated region
    $region2: #{cnn_forward.1} parent=1 // pred_check
      _
    $region3: #{cnn_forward.1} parent=1 // pred_check_branch
      %17 = sbr.rel (0) target = $region5
    $region4: #{cnn_forward.1} parent=1 // pred_region
      _
    $region5: #{cnn_forward.1} parent=1 // pred_fallthru
      _
    // Predicated region
    $region6: #{cnn_forward.1} parent=1 // pred_check
      _
    $region7: #{cnn_forward.1} parent=1 // pred_check_branch
      %19 = sbr.rel (0) target = $region9
    $region8: #{cnn_forward.1} parent=1 // pred_region
      _
    $region9: #{cnn_forward.1} parent=1 // pred_fallthru
      _
    // Predicated region
    $region10: #{cnn_forward.1} parent=1 // pred_check
      _
    $region11: #{cnn_forward.1} parent=1 // pred_check_branch
      %21 = sbr.rel (0) target = $region13
    $region12: #{cnn_forward.1} parent=1 // pred_region
      _
    $region13: #{cnn_forward.1} parent=1 // pred_fallthru
      _
    // Predicated region
    $region14: #{cnn_forward.1} parent=1 // pred_check
      _
    $region15: #{cnn_forward.1} parent=1 // pred_check_branch
      %23 = sbr.rel (0) target = $region17
    $region16: #{cnn_forward.1} parent=1 // pred_region
      _
    $region17: #{cnn_forward.1} parent=1 // pred_fallthru
      _
    // Predicated region
    $region18: #{cnn_forward.1} parent=1 // pred_check
      _
    $region19: #{cnn_forward.1} parent=1 // pred_check_branch
      %25 = sbr.rel (0) target = $region21
    $region20: #{cnn_forward.1} parent=1 // pred_region
      _
    $region21: #{cnn_forward.1} parent=1 // pred_fallthru
      _
    // Predicated region
    $region22: #{cnn_forward.1} parent=1 // pred_check
      _
    $region23: #{cnn_forward.1} parent=1 // pred_check_branch
      %27 = sbr.rel (0) target = $region25
    $region24: #{cnn_forward.1} parent=1 // pred_region
      _
    $region25: #{cnn_forward.1} parent=1 // pred_fallthru
      _
    // Predicated region
    $region26: #{cnn_forward.1} parent=1 // pred_check
      _
    $region27: #{cnn_forward.1} parent=1 // pred_check_branch
      %29 = sbr.rel (0) target = $region29
    $region28: #{cnn_forward.1} parent=1 // pred_region
      _
    $region29: #{cnn_forward.1} parent=1 // pred_fallthru
      _
    // Predicated region
    $region30: #{cnn_forward.1} parent=1 // pred_check
      _
    $region31: #{cnn_forward.1} parent=1 // pred_check_branch
      %31 = sbr.rel (0) target = $region33
    $region32: #{cnn_forward.1} parent=1 // pred_region
      _
    $region33: #{cnn_forward.1} parent=1 // pred_fallthru
      _
    // Predicated region
    $region34: #{cnn_forward.1} parent=1 // pred_check
      _
    $region35: #{cnn_forward.1} parent=1 // pred_check_branch
      %33 = sbr.rel (0) target = $region37
    $region36: #{cnn_forward.1} parent=1 // pred_region
      _
    $region37: #{cnn_forward.1} parent=1 // pred_fallthru
      _
    // Predicated region
    $region38: #{cnn_forward.1} parent=1 // pred_check
      _
    $region39: #{cnn_forward.1} parent=1 // pred_check_branch
      %35 = sbr.rel (0) target = $region41
    $region40: #{cnn_forward.1} parent=1 // pred_region
      _
    $region41: #{cnn_forward.1} parent=1 // pred_fallthru
      _
    %v37 = vld [vmem:[%s0] sm:$0xff]
    %v38 = vld [vmem:[%s0 + $0x8] sm:$0xff]
    %v39 = vld [vmem:[%s0 + $0x10] sm:$0xff]
    %v40 = vld [vmem:[%s0 + $0x18] sm:$0xff]
    %v41 = vpack.c.bf16 %v38, %v37
    %v42 = vpack.c.bf16 %v40, %v39
    %v43 = vld [vmem:[%s1] sm:$0xff]
    %v44 = vld [vmem:[%s1 + $0x8] sm:$0xf]
    %v45 = vld [vmem:[%s1 + $0xc] sm:$0xff]
    %v46 = vld [vmem:[%s1 + $0x14] sm:$0xf]
    %v47 = vld [vmem:[%s1 + $0x18] sm:$0xff]
    %v48 = vld [vmem:[%s1 + $0x20] sm:$0xf]
    %v49 = vld [vmem:[%s1 + $0x24] sm:$0xff]
    %v50 = vld [vmem:[%s1 + $0x2c] sm:$0xf]
    %v51 = vld [vmem:[%s1 + $0x30] sm:$0xff]
    %v52 = vld [vmem:[%s1 + $0x38] sm:$0xf]
    %v53 = vld [vmem:[%s1 + $0x3c] sm:$0xff]
    %v54 = vld [vmem:[%s1 + $0x44] sm:$0xf]
    %v55 = vld [vmem:[%s1 + $0x48] sm:$0xff]
    %v56 = vld [vmem:[%s1 + $0x50] sm:$0xf]
    %v57 = vld [vmem:[%s1 + $0x54] sm:$0xff]
    %v58 = vld [vmem:[%s1 + $0x5c] sm:$0xf]
    %v75 = vunpack.c.l.b16 %v43
    %v76 = vunpack.c.h.b16 %v43
    %v77 = vunpack.c.l.b16 %v44
    %v78 = vunpack.c.l.b16 %v45
    %v79 = vunpack.c.h.b16 %v45
    %v80 = vunpack.c.l.b16 %v46
    %v81 = vunpack.c.l.b16 %v47
    %v82 = vunpack.c.h.b16 %v47
    %v83 = vunpack.c.l.b16 %v48
    %v84 = vunpack.c.l.b16 %v49
    %v85 = vunpack.c.h.b16 %v49
    %v86 = vunpack.c.l.b16 %v50
    %v87 = vunpack.c.l.b16 %v51
    %v88 = vunpack.c.h.b16 %v51
    %v89 = vunpack.c.l.b16 %v52
    %v90 = vunpack.c.l.b16 %v53
    %v91 = vunpack.c.h.b16 %v53
    %v92 = vunpack.c.l.b16 %v54
    %v93 = vunpack.c.l.b16 %v55
    %v94 = vunpack.c.h.b16 %v55
    %v95 = vunpack.c.l.b16 %v56
    %v96 = vunpack.c.l.b16 %v57
    %v97 = vunpack.c.h.b16 %v57
    %v98 = vunpack.c.l.b16 %v58
    %v99 = vpack.c.b16 %v78, %v75
    %v100 = vpack.c.b16 %v79, %v76
    %v101 = vpack.c.b16 %v80, %v77
    %v102 = vpack.c.b16 %v84, %v81
    %v103 = vpack.c.b16 %v85, %v82
    %v104 = vpack.c.b16 %v86, %v83
    %v105 = vpack.c.b16 %v90, %v87
    %v106 = vpack.c.b16 %v91, %v88
    %v107 = vpack.c.b16 %v92, %v89
    %v108 = vpack.c.b16 %v96, %v93
    %v109 = vpack.c.b16 %v97, %v94
    %v110 = vpack.c.b16 %v98, %v95
    %vm123 = vcmask 523264
    %v125 = vsel %vm123, %v41, 0
    %v128 = vsel %vm123, %v42, 0
    %130 = vmatprep.subr.bf16.mxu0 %v100
    %131 = vmatpush1.bf16.msra.mxu0 %v99
    %132 = vmatprep.subr.bf16.mxu0 %v103
    %133 = vmatpush1.bf16.msra.mxu0 %v102
    %134 = vmatprep.subr.bf16.mxu0 %v106
    %135 = vmatpush1.bf16.msra.mxu0 %v105
    %136 = vmatprep.subr.bf16.mxu0 %v109
    %137 = vmatpush1.bf16.msra.mxu0 %v108
    %138 = vmatprep.subr.bf16.mxu0 0
    %139 = vmatpush1.bf16.msra.mxu0 0
    %140 = vmatprep.subr.bf16.mxu0 0
    %141 = vmatpush1.bf16.msra.mxu0 0
    %142 = vmatprep.subr.bf16.mxu0 0
    %143 = vmatpush1.bf16.msra.mxu0 0
    %144 = vmatprep.subr.bf16.mxu0 0
    %145 = vmatpush1.bf16.msra.mxu0 0
    %146 = vmatprep.subr.bf16.mxu0 0
    %147 = vmatpush1.bf16.msra.mxu0 0
    %148 = vmatprep.subr.bf16.mxu0 0
    %149 = vmatpush1.bf16.msra.mxu0 0
    %150 = vmatprep.subr.bf16.mxu0 0
    %151 = vmatpush1.bf16.msra.mxu0 0
    %152 = vmatprep.subr.bf16.mxu0 0
    %153 = vmatpush1.bf16.msra.mxu0 0
    %154 = vmatprep.subr.bf16.mxu0 0
    %155 = vmatpush1.bf16.msra.mxu0 0
    %156 = vmatprep.subr.bf16.mxu0 0
    %157 = vmatpush1.bf16.msra.mxu0 0
    %158 = vmatprep.subr.bf16.mxu0 0
    %159 = vmatpush1.bf16.msra.mxu0 0
    %160 = vmatprep.subr.bf16.mxu0 0
    %161 = vmatpush1.bf16.msra.mxu0 0
    %162 = vmatprep.mubr.bf16.mxu0 0
    %163 = vmatmul.mubr.bf16.gmra.mrb[0].mxu0 %v125
    %v164 = vpop.f32.mrb[0].mxu0
    %v165 = vadd.f32 0.0, %v164
    %v166 = vpop.f32.mrb[0].mxu0
    %v167 = vadd.f32 0.0, %v166
    %v168 = vpop.f32.mrb[0].mxu0
    %v169 = vadd.f32 0.0, %v168
    %v170 = vpop.f32.mrb[0].mxu0
    %v171 = vadd.f32 0.0, %v170
    %172 = vmatprep.mubr.bf16.mxu0 0
    %173 = vmatmul.mubr.bf16.gmra.mrb[0].mxu0 %v128
    %v174 = vpop.f32.mrb[0].mxu0
    %v175 = vadd.f32 0.0, %v174
    %v176 = vpop.f32.mrb[0].mxu0
    %v177 = vadd.f32 0.0, %v176
    %v178 = vpop.f32.mrb[0].mxu0
    %v179 = vadd.f32 0.0, %v178
    %v180 = vpop.f32.mrb[0].mxu0
    %v181 = vadd.f32 0.0, %v180
    %182 = vdwg.mxu0
    %183 = vmatprep.subr.bf16.mxu0 0
    %184 = vmatpush1.bf16.msra.mxu0 %v101
    %185 = vmatprep.subr.bf16.mxu0 0
    %186 = vmatpush1.bf16.msra.mxu0 %v104
    %187 = vmatprep.subr.bf16.mxu0 0
    %188 = vmatpush1.bf16.msra.mxu0 %v107
    %189 = vmatprep.subr.bf16.mxu0 0
    %190 = vmatpush1.bf16.msra.mxu0 %v110
    %191 = vmatprep.subr.bf16.mxu0 0
    %192 = vmatpush1.bf16.msra.mxu0 0
    %193 = vmatprep.subr.bf16.mxu0 0
    %194 = vmatpush1.bf16.msra.mxu0 0
    %195 = vmatprep.subr.bf16.mxu0 0
    %196 = vmatpush1.bf16.msra.mxu0 0
    %197 = vmatprep.subr.bf16.mxu0 0
    %198 = vmatpush1.bf16.msra.mxu0 0
    %199 = vmatprep.subr.bf16.mxu0 0
    %200 = vmatpush1.bf16.msra.mxu0 0
    %201 = vmatprep.subr.bf16.mxu0 0
    %202 = vmatpush1.bf16.msra.mxu0 0
    %203 = vmatprep.subr.bf16.mxu0 0
    %204 = vmatpush1.bf16.msra.mxu0 0
    %205 = vmatprep.subr.bf16.mxu0 0
    %206 = vmatpush1.bf16.msra.mxu0 0
    %207 = vmatprep.subr.bf16.mxu0 0
    %208 = vmatpush1.bf16.msra.mxu0 0
    %209 = vmatprep.subr.bf16.mxu0 0
    %210 = vmatpush1.bf16.msra.mxu0 0
    %211 = vmatprep.subr.bf16.mxu0 0
    %212 = vmatpush1.bf16.msra.mxu0 0
    %213 = vmatprep.subr.bf16.mxu0 0
    %214 = vmatpush1.bf16.msra.mxu0 0
    %215 = vmatprep.mubr.bf16.mxu0 0
    %216 = vmatmul.mubr.bf16.gmra.mrb[0].mxu0 %v125
    %v217 = vpop.f32.mrb[0].mxu0
    %v218 = vadd.f32 0.0, %v217
    %v219 = vpop.f32.mrb[0].mxu0
    %v220 = vpop.f32.mrb[0].mxu0
    %v221 = vadd.f32 0.0, %v220
    %v222 = vpop.f32.mrb[0].mxu0
    %223 = vmatprep.mubr.bf16.mxu0 0
    %224 = vmatmul.mubr.bf16.gmra.mrb[0].mxu0 %v128
    %v225 = vpop.f32.mrb[0].mxu0
    %v226 = vadd.f32 0.0, %v225
    %v227 = vpop.f32.mrb[0].mxu0
    %v228 = vpop.f32.mrb[0].mxu0
    %v229 = vadd.f32 0.0, %v228
    %v230 = vpop.f32.mrb[0].mxu0
    %231 = vdwg.mxu0
    %v232 = vlaneseq
    %v233 = vshrl.u32 %v232, 7
    %v234 = vadd.s32 %v233, 8
    %v235 = vadd.s32 %v233, 16
    %v236 = vadd.s32 %v233, 24
    %vm237 = vcmp.ge.s32.totalorder %v233, 2
    %vm238 = vcmp.ge.s32.totalorder %v234, 2
    %vm239 = vcmp.ge.s32.totalorder %v235, 2
    %vm240 = vcmp.ge.s32.totalorder %v236, 2
    %v241 = vrot.slane %v165, 6
    %v242 = vrot.slane %v169, 6
    %v243 = vrot.slane %v175, 6
    %v244 = vrot.slane %v179, 6
    %vm245 = vcmp.lt.s32.totalorder %v233, 2
    %v246 = vsel %vm245, %v243, %v244
    %v247 = vsel %vm245, %v242, %v243
    %v248 = vsel %vm245, %v241, %v242
    %v249 = vsel %vm245, %v244, %v241
    %v250 = vsel %vm237, %v249, 0.0
    %v251 = vsel %vm238, %v248, 0.0
    %v252 = vsel %vm239, %v247, 0.0
    %v253 = vsel %vm240, %v246, 0.0
    %vm254 = vcmp.lt.s32.totalorder %v233, 30
    %vm255 = vcmp.lt.s32.totalorder %v234, 30
    %vm256 = vcmp.lt.s32.totalorder %v235, 30
    %vm257 = vcmp.lt.s32.totalorder %v236, 30
    %v258 = vrot.slane %v218, 2
    %v259 = vrot.slane %v221, 2
    %v260 = vrot.slane %v226, 2
    %v261 = vrot.slane %v229, 2
    %vm262 = vcmp.lt.s32.totalorder %v233, 6
    %v263 = vsel %vm262, %v260, %v261
    %v264 = vsel %vm262, %v259, %v260
    %v265 = vsel %vm262, %v258, %v259
    %v266 = vsel %vm262, %v261, %v258
    %v267 = vsel %vm254, %v265, 0.0
    %v268 = vsel %vm255, %v264, 0.0
    %v269 = vsel %vm256, %v263, 0.0
    %v270 = vsel %vm257, %v266, 0.0
    %v271 = vadd.f32 %v250, %v167
    %v272 = vadd.f32 %v251, %v171
    %v273 = vadd.f32 %v252, %v177
    %v274 = vadd.f32 %v253, %v181
    %v275 = vadd.f32 %v271, %v267
    %v276 = vadd.f32 %v272, %v268
    %v277 = vadd.f32 %v273, %v269
    %v278 = vadd.f32 %v274, %v270
    %v279 = vld [vmem:[%s2] sm:$0x1]
    %v281 = vlaneseq
    %v282 = vshrl.u32 %v281, 7
    %v283 = vsub.s32 0, %v282
    %v284 = vrot.slane %v279, %v283
    %v286 = vadd.f32 %v275, %v284
    %v287 = vadd.f32 %v276, %v284
    %v288 = vadd.f32 %v277, %v284
    %v289 = vadd.f32 %v278, %v284
    %v290 = vmax.f32 %v286, 0.0
    %v291 = vmax.f32 %v287, 0.0
    %v292 = vmax.f32 %v288, 0.0
    %v293 = vmax.f32 %v289, 0.0
    %v294 = vpack.c.bf16 %v291, %v290
    %v295 = vpack.c.bf16 %v293, %v292
    %v296 = vld [vmem:[%s3] sm:$0xff]
    %v297 = vld [vmem:[%s3 + $0x8] sm:$0xf]
    %v298 = vld [vmem:[%s3 + $0xc] sm:$0xff]
    %v299 = vld [vmem:[%s3 + $0x14] sm:$0xf]
    %v300 = vld [vmem:[%s3 + $0x18] sm:$0xff]
    %v301 = vld [vmem:[%s3 + $0x20] sm:$0xf]
    %v302 = vld [vmem:[%s3 + $0x24] sm:$0xff]
    %v303 = vld [vmem:[%s3 + $0x2c] sm:$0xf]
    %v304 = vld [vmem:[%s3 + $0x30] sm:$0xff]
    %v305 = vld [vmem:[%s3 + $0x38] sm:$0xf]
    %v306 = vld [vmem:[%s3 + $0x3c] sm:$0xff]
    %v307 = vld [vmem:[%s3 + $0x44] sm:$0xf]
    %v308 = vld [vmem:[%s3 + $0x48] sm:$0xff]
    %v309 = vld [vmem:[%s3 + $0x50] sm:$0xf]
    %v310 = vld [vmem:[%s3 + $0x54] sm:$0xff]
    %v311 = vld [vmem:[%s3 + $0x5c] sm:$0xf]
    %v312 = vld [vmem:[%s3 + $0x60] sm:$0xff]
    %v313 = vld [vmem:[%s3 + $0x68] sm:$0xf]
    %v314 = vld [vmem:[%s3 + $0x6c] sm:$0xff]
    %v315 = vld [vmem:[%s3 + $0x74] sm:$0xf]
    %v316 = vld [vmem:[%s3 + $0x78] sm:$0xff]
    %v317 = vld [vmem:[%s3 + $0x80] sm:$0xf]
    %v318 = vld [vmem:[%s3 + $0x84] sm:$0xff]
    %v319 = vld [vmem:[%s3 + $0x8c] sm:$0xf]
    %v320 = vld [vmem:[%s3 + $0x90] sm:$0xff]
    %v321 = vld [vmem:[%s3 + $0x98] sm:$0xf]
    %v322 = vld [vmem:[%s3 + $0x9c] sm:$0xff]
    %v323 = vld [vmem:[%s3 + $0xa4] sm:$0xf]
    %v324 = vld [vmem:[%s3 + $0xa8] sm:$0xff]
    %v325 = vld [vmem:[%s3 + $0xb0] sm:$0xf]
    %v326 = vld [vmem:[%s3 + $0xb4] sm:$0xff]
    %v327 = vld [vmem:[%s3 + $0xbc] sm:$0xf]
    %v360 = vunpack.c.l.b16 %v296
    %v361 = vunpack.c.h.b16 %v296
    %v362 = vunpack.c.l.b16 %v297
    %v363 = vunpack.c.l.b16 %v298
    %v364 = vunpack.c.h.b16 %v298
    %v365 = vunpack.c.l.b16 %v299
    %v366 = vunpack.c.l.b16 %v300
    %v367 = vunpack.c.h.b16 %v300
    %v368 = vunpack.c.l.b16 %v301
    %v369 = vunpack.c.l.b16 %v302
    %v370 = vunpack.c.h.b16 %v302
    %v371 = vunpack.c.l.b16 %v303
    %v372 = vunpack.c.l.b16 %v304
    %v373 = vunpack.c.h.b16 %v304
    %v374 = vunpack.c.l.b16 %v305
    %v375 = vunpack.c.l.b16 %v306
    %v376 = vunpack.c.h.b16 %v306
    %v377 = vunpack.c.l.b16 %v307
    %v378 = vunpack.c.l.b16 %v308
    %v379 = vunpack.c.h.b16 %v308
    %v380 = vunpack.c.l.b16 %v309
    %v381 = vunpack.c.l.b16 %v310
    %v382 = vunpack.c.h.b16 %v310
    %v383 = vunpack.c.l.b16 %v311
    %v384 = vunpack.c.l.b16 %v312
    %v385 = vunpack.c.h.b16 %v312
    %v386 = vunpack.c.l.b16 %v313
    %v387 = vunpack.c.l.b16 %v314
    %v388 = vunpack.c.h.b16 %v314
    %v389 = vunpack.c.l.b16 %v315
    %v390 = vunpack.c.l.b16 %v316
    %v391 = vunpack.c.h.b16 %v316
    %v392 = vunpack.c.l.b16 %v317
    %v393 = vunpack.c.l.b16 %v318
    %v394 = vunpack.c.h.b16 %v318
    %v395 = vunpack.c.l.b16 %v319
    %v396 = vunpack.c.l.b16 %v320
    %v397 = vunpack.c.h.b16 %v320
    %v398 = vunpack.c.l.b16 %v321
    %v399 = vunpack.c.l.b16 %v322
    %v400 = vunpack.c.h.b16 %v322
    %v401 = vunpack.c.l.b16 %v323
    %v402 = vunpack.c.l.b16 %v324
    %v403 = vunpack.c.h.b16 %v324
    %v404 = vunpack.c.l.b16 %v325
    %v405 = vunpack.c.l.b16 %v326
    %v406 = vunpack.c.h.b16 %v326
    %v407 = vunpack.c.l.b16 %v327
    %v408 = vpack.c.b16 %v363, %v360
    %v409 = vpack.c.b16 %v364, %v361
    %v410 = vpack.c.b16 %v365, %v362
    %v411 = vpack.c.b16 %v369, %v366
    %v412 = vpack.c.b16 %v370, %v367
    %v413 = vpack.c.b16 %v371, %v368
    %v414 = vpack.c.b16 %v375, %v372
    %v415 = vpack.c.b16 %v376, %v373
    %v416 = vpack.c.b16 %v377, %v374
    %v417 = vpack.c.b16 %v381, %v378
    %v418 = vpack.c.b16 %v382, %v379
    %v419 = vpack.c.b16 %v383, %v380
    %v420 = vpack.c.b16 %v387, %v384
    %v421 = vpack.c.b16 %v388, %v385
    %v422 = vpack.c.b16 %v389, %v386
    %v423 = vpack.c.b16 %v393, %v390
    %v424 = vpack.c.b16 %v394, %v391
    %v425 = vpack.c.b16 %v395, %v392
    %v426 = vpack.c.b16 %v399, %v396
    %v427 = vpack.c.b16 %v400, %v397
    %v428 = vpack.c.b16 %v401, %v398
    %v429 = vpack.c.b16 %v405, %v402
    %v430 = vpack.c.b16 %v406, %v403
    %v431 = vpack.c.b16 %v407, %v404
    %456 = vmatprep.subr.bf16.mxu0 %v409
    %457 = vmatpush1.bf16.msra.mxu0 %v408
    %458 = vmatprep.subr.bf16.mxu0 %v412
    %459 = vmatpush1.bf16.msra.mxu0 %v411
    %460 = vmatprep.subr.bf16.mxu0 %v415
    %461 = vmatpush1.bf16.msra.mxu0 %v414
    %462 = vmatprep.subr.bf16.mxu0 %v418
    %463 = vmatpush1.bf16.msra.mxu0 %v417
    %464 = vmatprep.subr.bf16.mxu0 %v421
    %465 = vmatpush1.bf16.msra.mxu0 %v420
    %466 = vmatprep.subr.bf16.mxu0 %v424
    %467 = vmatpush1.bf16.msra.mxu0 %v423
    %468 = vmatprep.subr.bf16.mxu0 %v427
    %469 = vmatpush1.bf16.msra.mxu0 %v426
    %470 = vmatprep.subr.bf16.mxu0 %v430
    %471 = vmatpush1.bf16.msra.mxu0 %v429
    %472 = vmatprep.subr.bf16.mxu0 0
    %473 = vmatpush1.bf16.msra.mxu0 0
    %474 = vmatprep.subr.bf16.mxu0 0
    %475 = vmatpush1.bf16.msra.mxu0 0
    %476 = vmatprep.subr.bf16.mxu0 0
    %477 = vmatpush1.bf16.msra.mxu0 0
    %478 = vmatprep.subr.bf16.mxu0 0
    %479 = vmatpush1.bf16.msra.mxu0 0
    %480 = vmatprep.subr.bf16.mxu0 0
    %481 = vmatpush1.bf16.msra.mxu0 0
    %482 = vmatprep.subr.bf16.mxu0 0
    %483 = vmatpush1.bf16.msra.mxu0 0
    %484 = vmatprep.subr.bf16.mxu0 0
    %485 = vmatpush1.bf16.msra.mxu0 0
    %486 = vmatprep.subr.bf16.mxu0 0
    %487 = vmatpush1.bf16.msra.mxu0 0
    %488 = vmatprep.mubr.bf16.mxu0 0
    %489 = vmatmul.mubr.bf16.gmra.mrb[0].mxu0 %v294
    %v490 = vpop.f32.mrb[0].mxu0
    %v491 = vadd.f32 0.0, %v490
    %v492 = vpop.f32.mrb[0].mxu0
    %v493 = vadd.f32 0.0, %v492
    %v494 = vpop.f32.mrb[0].mxu0
    %v495 = vadd.f32 0.0, %v494
    %v496 = vpop.f32.mrb[0].mxu0
    %v497 = vadd.f32 0.0, %v496
    %498 = vmatprep.mubr.bf16.mxu0 0
    %499 = vmatmul.mubr.bf16.gmra.mrb[0].mxu0 %v295
    %v500 = vpop.f32.mrb[0].mxu0
    %v501 = vadd.f32 0.0, %v500
    %v502 = vpop.f32.mrb[0].mxu0
    %v503 = vadd.f32 0.0, %v502
    %v504 = vpop.f32.mrb[0].mxu0
    %v505 = vadd.f32 0.0, %v504
    %v506 = vpop.f32.mrb[0].mxu0
    %v507 = vadd.f32 0.0, %v506
    %508 = vdwg.mxu0
    %509 = vmatprep.subr.bf16.mxu0 0
    %510 = vmatpush1.bf16.msra.mxu0 %v410
    %511 = vmatprep.subr.bf16.mxu0 0
    %512 = vmatpush1.bf16.msra.mxu0 %v413
    %513 = vmatprep.subr.bf16.mxu0 0
    %514 = vmatpush1.bf16.msra.mxu0 %v416
    %515 = vmatprep.subr.bf16.mxu0 0
    %516 = vmatpush1.bf16.msra.mxu0 %v419
    %517 = vmatprep.subr.bf16.mxu0 0
    %518 = vmatpush1.bf16.msra.mxu0 %v422
    %519 = vmatprep.subr.bf16.mxu0 0
    %520 = vmatpush1.bf16.msra.mxu0 %v425
    %521 = vmatprep.subr.bf16.mxu0 0
    %522 = vmatpush1.bf16.msra.mxu0 %v428
    %523 = vmatprep.subr.bf16.mxu0 0
    %524 = vmatpush1.bf16.msra.mxu0 %v431
    %525 = vmatprep.subr.bf16.mxu0 0
    %526 = vmatpush1.bf16.msra.mxu0 0
    %527 = vmatprep.subr.bf16.mxu0 0
    %528 = vmatpush1.bf16.msra.mxu0 0
    %529 = vmatprep.subr.bf16.mxu0 0
    %530 = vmatpush1.bf16.msra.mxu0 0
    %531 = vmatprep.subr.bf16.mxu0 0
    %532 = vmatpush1.bf16.msra.mxu0 0
    %533 = vmatprep.subr.bf16.mxu0 0
    %534 = vmatpush1.bf16.msra.mxu0 0
    %535 = vmatprep.subr.bf16.mxu0 0
    %536 = vmatpush1.bf16.msra.mxu0 0
    %537 = vmatprep.subr.bf16.mxu0 0
    %538 = vmatpush1.bf16.msra.mxu0 0
    %539 = vmatprep.subr.bf16.mxu0 0
    %540 = vmatpush1.bf16.msra.mxu0 0
    %541 = vmatprep.mubr.bf16.mxu0 0
    %542 = vmatmul.mubr.bf16.gmra.mrb[0].mxu0 %v294
    %v543 = vpop.f32.mrb[0].mxu0
    %v544 = vadd.f32 0.0, %v543
    %v545 = vpop.f32.mrb[0].mxu0
    %v546 = vpop.f32.mrb[0].mxu0
    %v547 = vadd.f32 0.0, %v546
    %v548 = vpop.f32.mrb[0].mxu0
    %549 = vmatprep.mubr.bf16.mxu0 0
    %550 = vmatmul.mubr.bf16.gmra.mrb[0].mxu0 %v295
    %v551 = vpop.f32.mrb[0].mxu0
    %v552 = vadd.f32 0.0, %v551
    %v553 = vpop.f32.mrb[0].mxu0
    %v554 = vpop.f32.mrb[0].mxu0
    %v555 = vadd.f32 0.0, %v554
    %v556 = vpop.f32.mrb[0].mxu0
    %557 = vdwg.mxu0
    %v558 = vrot.slane %v491, 6
    %v559 = vrot.slane %v495, 6
    %v560 = vrot.slane %v501, 6
    %v561 = vrot.slane %v505, 6
    %v562 = vsel %vm245, %v560, %v561
    %v563 = vsel %vm245, %v559, %v560
    %v564 = vsel %vm245, %v558, %v559
    %v565 = vsel %vm245, %v561, %v558
    %v566 = vsel %vm237, %v565, 0.0
    %v567 = vsel %vm238, %v564, 0.0
    %v568 = vsel %vm239, %v563, 0.0
    %v569 = vsel %vm240, %v562, 0.0
    %v570 = vrot.slane %v544, 2
    %v571 = vrot.slane %v547, 2
    %v572 = vrot.slane %v552, 2
    %v573 = vrot.slane %v555, 2
    %v574 = vsel %vm262, %v572, %v573
    %v575 = vsel %vm262, %v571, %v572
    %v576 = vsel %vm262, %v570, %v571
    %v577 = vsel %vm262, %v573, %v570
    %v578 = vsel %vm254, %v576, 0.0
    %v579 = vsel %vm255, %v575, 0.0
    %v580 = vsel %vm256, %v574, 0.0
    %v581 = vsel %vm257, %v577, 0.0
    %v582 = vadd.f32 %v566, %v493
    %v583 = vadd.f32 %v567, %v497
    %v584 = vadd.f32 %v568, %v503
    %v585 = vadd.f32 %v569, %v507
    %v586 = vadd.f32 %v582, %v578
    %v587 = vadd.f32 %v583, %v579
    %v588 = vadd.f32 %v584, %v580
    %v589 = vadd.f32 %v585, %v581
    %v590 = vld [vmem:[%s4] sm:$0x1]
    %v592 = vlaneseq
    %v593 = vshrl.u32 %v592, 7
    %v594 = vsub.s32 0, %v593
    %v595 = vrot.slane %v590, %v594
    %v597 = vadd.f32 %v586, %v595
    %v598 = vadd.f32 %v587, %v595
    %v599 = vadd.f32 %v588, %v595
    %v600 = vadd.f32 %v589, %v595
    %v601 = vmax.f32 %v597, 0.0
    %v602 = vmax.f32 %v598, 0.0
    %v603 = vmax.f32 %v599, 0.0
    %v604 = vmax.f32 %v600, 0.0
    %v605 = vpack.c.bf16 %v602, %v601
    %v606 = vpack.c.bf16 %v604, %v603
    %v607 = vld [vmem:[%s5] sm:$0xff]
    %v608 = vld [vmem:[%s5 + $0x8] sm:$0xff]
    %v609 = vld [vmem:[%s5 + $0x10] sm:$0xff]
    %v610 = vld [vmem:[%s5 + $0x18] sm:$0xff]
    %v611 = vld [vmem:[%s5 + $0x20] sm:$0xff]
    %v612 = vld [vmem:[%s5 + $0x28] sm:$0xff]
    %v613 = vld [vmem:[%s5 + $0x30] sm:$0xff]
    %v614 = vld [vmem:[%s5 + $0x38] sm:$0xff]
    %v615 = vld [vmem:[%s5 + $0x40] sm:$0xff]
    %v616 = vld [vmem:[%s5 + $0x48] sm:$0xff]
    %v617 = vld [vmem:[%s5 + $0x50] sm:$0xff]
    %v618 = vld [vmem:[%s5 + $0x58] sm:$0xff]
    %v619 = vld [vmem:[%s5 + $0x60] sm:$0xff]
    %v620 = vld [vmem:[%s5 + $0x68] sm:$0xff]
    %v621 = vld [vmem:[%s5 + $0x70] sm:$0xff]
    %v622 = vld [vmem:[%s5 + $0x78] sm:$0xff]
    %v623 = vld [vmem:[%s5 + $0x80] sm:$0xff]
    %v624 = vld [vmem:[%s5 + $0x88] sm:$0xff]
    %v625 = vld [vmem:[%s5 + $0x90] sm:$0xff]
    %v626 = vld [vmem:[%s5 + $0x98] sm:$0xff]
    %v627 = vld [vmem:[%s5 + $0xa0] sm:$0xff]
    %v628 = vld [vmem:[%s5 + $0xa8] sm:$0xff]
    %v629 = vld [vmem:[%s5 + $0xb0] sm:$0xff]
    %v630 = vld [vmem:[%s5 + $0xb8] sm:$0xff]
    %v631 = vld [vmem:[%s5 + $0xc0] sm:$0xff]
    %v632 = vld [vmem:[%s5 + $0xc8] sm:$0xff]
    %v633 = vld [vmem:[%s5 + $0xd0] sm:$0xff]
    %v634 = vld [vmem:[%s5 + $0xd8] sm:$0xff]
    %v635 = vld [vmem:[%s5 + $0xe0] sm:$0xff]
    %v636 = vld [vmem:[%s5 + $0xe8] sm:$0xff]
    %v637 = vld [vmem:[%s5 + $0xf0] sm:$0xff]
    %v638 = vld [vmem:[%s5 + $0xf8] sm:$0xff]
    %v671 = vunpack.c.l.b16 %v607
    %v672 = vunpack.c.h.b16 %v607
    %v673 = vunpack.c.l.b16 %v608
    %v674 = vunpack.c.h.b16 %v608
    %v675 = vunpack.c.l.b16 %v609
    %v676 = vunpack.c.h.b16 %v609
    %v677 = vunpack.c.l.b16 %v610
    %v678 = vunpack.c.h.b16 %v610
    %v679 = vunpack.c.l.b16 %v611
    %v680 = vunpack.c.h.b16 %v611
    %v681 = vunpack.c.l.b16 %v612
    %v682 = vunpack.c.h.b16 %v612
    %v683 = vunpack.c.l.b16 %v613
    %v684 = vunpack.c.h.b16 %v613
    %v685 = vunpack.c.l.b16 %v614
    %v686 = vunpack.c.h.b16 %v614
    %v687 = vunpack.c.l.b16 %v615
    %v688 = vunpack.c.h.b16 %v615
    %v689 = vunpack.c.l.b16 %v616
    %v690 = vunpack.c.h.b16 %v616
    %v691 = vunpack.c.l.b16 %v617
    %v692 = vunpack.c.h.b16 %v617
    %v693 = vunpack.c.l.b16 %v618
    %v694 = vunpack.c.h.b16 %v618
    %v695 = vunpack.c.l.b16 %v619
    %v696 = vunpack.c.h.b16 %v619
    %v697 = vunpack.c.l.b16 %v620
    %v698 = vunpack.c.h.b16 %v620
    %v699 = vunpack.c.l.b16 %v621
    %v700 = vunpack.c.h.b16 %v621
    %v701 = vunpack.c.l.b16 %v622
    %v702 = vunpack.c.h.b16 %v622
    %v703 = vunpack.c.l.b16 %v623
    %v704 = vunpack.c.h.b16 %v623
    %v705 = vunpack.c.l.b16 %v624
    %v706 = vunpack.c.h.b16 %v624
    %v707 = vunpack.c.l.b16 %v625
    %v708 = vunpack.c.h.b16 %v625
    %v709 = vunpack.c.l.b16 %v626
    %v710 = vunpack.c.h.b16 %v626
    %v711 = vunpack.c.l.b16 %v627
    %v712 = vunpack.c.h.b16 %v627
    %v713 = vunpack.c.l.b16 %v628
    %v714 = vunpack.c.h.b16 %v628
    %v715 = vunpack.c.l.b16 %v629
    %v716 = vunpack.c.h.b16 %v629
    %v717 = vunpack.c.l.b16 %v630
    %v718 = vunpack.c.h.b16 %v630
    %v719 = vunpack.c.l.b16 %v631
    %v720 = vunpack.c.h.b16 %v631
    %v721 = vunpack.c.l.b16 %v632
    %v722 = vunpack.c.h.b16 %v632
    %v723 = vunpack.c.l.b16 %v633
    %v724 = vunpack.c.h.b16 %v633
    %v725 = vunpack.c.l.b16 %v634
    %v726 = vunpack.c.h.b16 %v634
    %v727 = vunpack.c.l.b16 %v635
    %v728 = vunpack.c.h.b16 %v635
    %v729 = vunpack.c.l.b16 %v636
    %v730 = vunpack.c.h.b16 %v636
    %v731 = vunpack.c.l.b16 %v637
    %v732 = vunpack.c.h.b16 %v637
    %v733 = vunpack.c.l.b16 %v638
    %v734 = vunpack.c.h.b16 %v638
    %v735 = vpack.c.b16 %v675, %v671
    %v736 = vpack.c.b16 %v676, %v672
    %v737 = vpack.c.b16 %v677, %v673
    %v738 = vpack.c.b16 %v678, %v674
    %v739 = vpack.c.b16 %v683, %v679
    %v740 = vpack.c.b16 %v684, %v680
    %v741 = vpack.c.b16 %v685, %v681
    %v742 = vpack.c.b16 %v686, %v682
    %v743 = vpack.c.b16 %v691, %v687
    %v744 = vpack.c.b16 %v692, %v688
    %v745 = vpack.c.b16 %v693, %v689
    %v746 = vpack.c.b16 %v694, %v690
    %v747 = vpack.c.b16 %v699, %v695
    %v748 = vpack.c.b16 %v700, %v696
    %v749 = vpack.c.b16 %v701, %v697
    %v750 = vpack.c.b16 %v702, %v698
    %v751 = vpack.c.b16 %v707, %v703
    %v752 = vpack.c.b16 %v708, %v704
    %v753 = vpack.c.b16 %v709, %v705
    %v754 = vpack.c.b16 %v710, %v706
    %v755 = vpack.c.b16 %v715, %v711
    %v756 = vpack.c.b16 %v716, %v712
    %v757 = vpack.c.b16 %v717, %v713
    %v758 = vpack.c.b16 %v718, %v714
    %v759 = vpack.c.b16 %v723, %v719
    %v760 = vpack.c.b16 %v724, %v720
    %v761 = vpack.c.b16 %v725, %v721
    %v762 = vpack.c.b16 %v726, %v722
    %v763 = vpack.c.b16 %v731, %v727
    %v764 = vpack.c.b16 %v732, %v728
    %v765 = vpack.c.b16 %v733, %v729
    %v766 = vpack.c.b16 %v734, %v730
    %799 = vmatprep.subr.bf16.mxu0 %v736
    %800 = vmatpush1.bf16.msra.mxu0 %v735
    %801 = vmatprep.subr.bf16.mxu0 %v740
    %802 = vmatpush1.bf16.msra.mxu0 %v739
    %803 = vmatprep.subr.bf16.mxu0 %v744
    %804 = vmatpush1.bf16.msra.mxu0 %v743
    %805 = vmatprep.subr.bf16.mxu0 %v748
    %806 = vmatpush1.bf16.msra.mxu0 %v747
    %807 = vmatprep.subr.bf16.mxu0 %v752
    %808 = vmatpush1.bf16.msra.mxu0 %v751
    %809 = vmatprep.subr.bf16.mxu0 %v756
    %810 = vmatpush1.bf16.msra.mxu0 %v755
    %811 = vmatprep.subr.bf16.mxu0 %v760
    %812 = vmatpush1.bf16.msra.mxu0 %v759
    %813 = vmatprep.subr.bf16.mxu0 %v764
    %814 = vmatpush1.bf16.msra.mxu0 %v763
    %815 = vmatprep.subr.bf16.mxu0 0
    %816 = vmatpush1.bf16.msra.mxu0 0
    %817 = vmatprep.subr.bf16.mxu0 0
    %818 = vmatpush1.bf16.msra.mxu0 0
    %819 = vmatprep.subr.bf16.mxu0 0
    %820 = vmatpush1.bf16.msra.mxu0 0
    %821 = vmatprep.subr.bf16.mxu0 0
    %822 = vmatpush1.bf16.msra.mxu0 0
    %823 = vmatprep.subr.bf16.mxu0 0
    %824 = vmatpush1.bf16.msra.mxu0 0
    %825 = vmatprep.subr.bf16.mxu0 0
    %826 = vmatpush1.bf16.msra.mxu0 0
    %827 = vmatprep.subr.bf16.mxu0 0
    %828 = vmatpush1.bf16.msra.mxu0 0
    %829 = vmatprep.subr.bf16.mxu0 0
    %830 = vmatpush1.bf16.msra.mxu0 0
    %831 = vmatprep.mubr.bf16.mxu0 0
    %832 = vmatmul.mubr.bf16.gmra.mrb[0].mxu0 %v605
    %v833 = vpop.f32.mrb[0].mxu0
    %v834 = vadd.f32 0.0, %v833
    %v835 = vpop.f32.mrb[0].mxu0
    %v836 = vadd.f32 0.0, %v835
    %v837 = vpop.f32.mrb[0].mxu0
    %v838 = vadd.f32 0.0, %v837
    %v839 = vpop.f32.mrb[0].mxu0
    %v840 = vadd.f32 0.0, %v839
    %841 = vmatprep.mubr.bf16.mxu0 0
    %842 = vmatmul.mubr.bf16.gmra.mrb[0].mxu0 %v606
    %v843 = vpop.f32.mrb[0].mxu0
    %v844 = vadd.f32 0.0, %v843
    %v845 = vpop.f32.mrb[0].mxu0
    %v846 = vadd.f32 0.0, %v845
    %v847 = vpop.f32.mrb[0].mxu0
    %v848 = vadd.f32 0.0, %v847
    %v849 = vpop.f32.mrb[0].mxu0
    %v850 = vadd.f32 0.0, %v849
    %851 = vdwg.mxu0
    %852 = vmatprep.subr.bf16.mxu0 %v738
    %853 = vmatpush1.bf16.msra.mxu0 %v737
    %854 = vmatprep.subr.bf16.mxu0 %v742
    %855 = vmatpush1.bf16.msra.mxu0 %v741
    %856 = vmatprep.subr.bf16.mxu0 %v746
    %857 = vmatpush1.bf16.msra.mxu0 %v745
    %858 = vmatprep.subr.bf16.mxu0 %v750
    %859 = vmatpush1.bf16.msra.mxu0 %v749
    %860 = vmatprep.subr.bf16.mxu0 %v754
    %861 = vmatpush1.bf16.msra.mxu0 %v753
    %862 = vmatprep.subr.bf16.mxu0 %v758
    %863 = vmatpush1.bf16.msra.mxu0 %v757
    %864 = vmatprep.subr.bf16.mxu0 %v762
    %865 = vmatpush1.bf16.msra.mxu0 %v761
    %866 = vmatprep.subr.bf16.mxu0 %v766
    %867 = vmatpush1.bf16.msra.mxu0 %v765
    %868 = vmatprep.subr.bf16.mxu0 0
    %869 = vmatpush1.bf16.msra.mxu0 0
    %870 = vmatprep.subr.bf16.mxu0 0
    %871 = vmatpush1.bf16.msra.mxu0 0
    %872 = vmatprep.subr.bf16.mxu0 0
    %873 = vmatpush1.bf16.msra.mxu0 0
    %874 = vmatprep.subr.bf16.mxu0 0
    %875 = vmatpush1.bf16.msra.mxu0 0
    %876 = vmatprep.subr.bf16.mxu0 0
    %877 = vmatpush1.bf16.msra.mxu0 0
    %878 = vmatprep.subr.bf16.mxu0 0
    %879 = vmatpush1.bf16.msra.mxu0 0
    %880 = vmatprep.subr.bf16.mxu0 0
    %881 = vmatpush1.bf16.msra.mxu0 0
    %882 = vmatprep.subr.bf16.mxu0 0
    %883 = vmatpush1.bf16.msra.mxu0 0
    %884 = vmatprep.mubr.bf16.mxu0 0
    %885 = vmatmul.mubr.bf16.gmra.mrb[0].mxu0 %v605
    %v886 = vpop.f32.mrb[0].mxu0
    %v887 = vadd.f32 0.0, %v886
    %v888 = vpop.f32.mrb[0].mxu0
    %v889 = vadd.f32 0.0, %v888
    %v890 = vpop.f32.mrb[0].mxu0
    %v891 = vadd.f32 0.0, %v890
    %v892 = vpop.f32.mrb[0].mxu0
    %v893 = vadd.f32 0.0, %v892
    %894 = vmatprep.mubr.bf16.mxu0 0
    %895 = vmatmul.mubr.bf16.gmra.mrb[0].mxu0 %v606
    %v896 = vpop.f32.mrb[0].mxu0
    %v897 = vadd.f32 0.0, %v896
    %v898 = vpop.f32.mrb[0].mxu0
    %v899 = vadd.f32 0.0, %v898
    %v900 = vpop.f32.mrb[0].mxu0
    %v901 = vadd.f32 0.0, %v900
    %v902 = vpop.f32.mrb[0].mxu0
    %v903 = vadd.f32 0.0, %v902
    %904 = vdwg.mxu0
    %v905 = vld [vmem:[%s6] sm:$0xff]
    %v906 = vld [vmem:[%s6 + $0x8] sm:$0xff]
    %v907 = vld [vmem:[%s6 + $0x10] sm:$0xff]
    %v908 = vld [vmem:[%s6 + $0x18] sm:$0xff]
    %v909 = vld [vmem:[%s6 + $0x20] sm:$0xff]
    %v910 = vld [vmem:[%s6 + $0x28] sm:$0xff]
    %v911 = vld [vmem:[%s6 + $0x30] sm:$0xff]
    %v912 = vld [vmem:[%s6 + $0x38] sm:$0xff]
    %v913 = vld [vmem:[%s6 + $0x40] sm:$0xff]
    %v914 = vld [vmem:[%s6 + $0x48] sm:$0xff]
    %v915 = vld [vmem:[%s6 + $0x50] sm:$0xff]
    %v916 = vld [vmem:[%s6 + $0x58] sm:$0xff]
    %v917 = vld [vmem:[%s6 + $0x60] sm:$0xff]
    %v918 = vld [vmem:[%s6 + $0x68] sm:$0xff]
    %v919 = vld [vmem:[%s6 + $0x70] sm:$0xff]
    %v920 = vld [vmem:[%s6 + $0x78] sm:$0xff]
    %v921 = vmul.f32 %v834, %v905
    %v922 = vmul.f32 %v836, %v906
    %v923 = vmul.f32 %v887, %v907
    %v924 = vmul.f32 %v889, %v908
    %v925 = vmul.f32 %v838, %v909
    %v926 = vmul.f32 %v840, %v910
    %v927 = vmul.f32 %v891, %v911
    %v928 = vmul.f32 %v893, %v912
    %v929 = vmul.f32 %v844, %v913
    %v930 = vmul.f32 %v846, %v914
    %v931 = vmul.f32 %v897, %v915
    %v932 = vmul.f32 %v899, %v916
    %v933 = vmul.f32 %v848, %v917
    %v934 = vmul.f32 %v850, %v918
    %v935 = vmul.f32 %v901, %v919
    %v936 = vmul.f32 %v903, %v920
    %v937 = vpack.c.bf16 %v925, %v921
    %v938 = vpack.c.bf16 %v926, %v922
    %v939 = vpack.c.bf16 %v927, %v923
    %v940 = vpack.c.bf16 %v928, %v924
    %v941 = vpack.c.bf16 %v933, %v929
    %v942 = vpack.c.bf16 %v934, %v930
    %v943 = vpack.c.bf16 %v935, %v931
    %v944 = vpack.c.bf16 %v936, %v932
    %v945 = vld [vmem:[%s7] sm:$0xf]
    %v946 = vld [vmem:[%s7 + $0x4] sm:$0xf]
    %v947 = vld [vmem:[%s7 + $0x8] sm:$0xf]
    %v948 = vld [vmem:[%s7 + $0xc] sm:$0xf]
    %v949 = vld [vmem:[%s7 + $0x10] sm:$0xf]
    %v950 = vld [vmem:[%s7 + $0x14] sm:$0xf]
    %v951 = vld [vmem:[%s7 + $0x18] sm:$0xf]
    %v952 = vld [vmem:[%s7 + $0x1c] sm:$0xf]
    %v953 = vld [vmem:[%s7 + $0x20] sm:$0xf]
    %v954 = vld [vmem:[%s7 + $0x24] sm:$0xf]
    %v955 = vld [vmem:[%s7 + $0x28] sm:$0xf]
    %v956 = vld [vmem:[%s7 + $0x2c] sm:$0xf]
    %v957 = vld [vmem:[%s7 + $0x30] sm:$0xf]
    %v958 = vld [vmem:[%s7 + $0x34] sm:$0xf]
    %v959 = vld [vmem:[%s7 + $0x38] sm:$0xf]
    %v960 = vld [vmem:[%s7 + $0x3c] sm:$0xf]
    %v961 = vld [vmem:[%s7 + $0x40] sm:$0xf]
    %v962 = vld [vmem:[%s7 + $0x44] sm:$0xf]
    %v963 = vld [vmem:[%s7 + $0x48] sm:$0xf]
    %v964 = vld [vmem:[%s7 + $0x4c] sm:$0xf]
    %v965 = vld [vmem:[%s7 + $0x50] sm:$0xf]
    %v966 = vld [vmem:[%s7 + $0x54] sm:$0xf]
    %v967 = vld [vmem:[%s7 + $0x58] sm:$0xf]
    %v968 = vld [vmem:[%s7 + $0x5c] sm:$0xf]
    %v969 = vld [vmem:[%s7 + $0x60] sm:$0xf]
    %v970 = vld [vmem:[%s7 + $0x64] sm:$0xf]
    %v971 = vld [vmem:[%s7 + $0x68] sm:$0xf]
    %v972 = vld [vmem:[%s7 + $0x6c] sm:$0xf]
    %v973 = vld [vmem:[%s7 + $0x70] sm:$0xf]
    %v974 = vld [vmem:[%s7 + $0x74] sm:$0xf]
    %v975 = vld [vmem:[%s7 + $0x78] sm:$0xf]
    %v976 = vld [vmem:[%s7 + $0x7c] sm:$0xf]
    %v977 = vld [vmem:[%s7 + $0x80] sm:$0xf]
    %v978 = vld [vmem:[%s7 + $0x84] sm:$0xf]
    %v979 = vld [vmem:[%s7 + $0x88] sm:$0xf]
    %v980 = vld [vmem:[%s7 + $0x8c] sm:$0xf]
    %v981 = vld [vmem:[%s7 + $0x90] sm:$0xf]
    %v982 = vld [vmem:[%s7 + $0x94] sm:$0xf]
    %v983 = vld [vmem:[%s7 + $0x98] sm:$0xf]
    %v984 = vld [vmem:[%s7 + $0x9c] sm:$0xf]
    %v985 = vld [vmem:[%s7 + $0xa0] sm:$0xf]
    %v986 = vld [vmem:[%s7 + $0xa4] sm:$0xf]
    %v987 = vld [vmem:[%s7 + $0xa8] sm:$0xf]
    %v988 = vld [vmem:[%s7 + $0xac] sm:$0xf]
    %v989 = vld [vmem:[%s7 + $0xb0] sm:$0xf]
    %v990 = vld [vmem:[%s7 + $0xb4] sm:$0xf]
    %v991 = vld [vmem:[%s7 + $0xb8] sm:$0xf]
    %v992 = vld [vmem:[%s7 + $0xbc] sm:$0xf]
    %v993 = vld [vmem:[%s7 + $0xc0] sm:$0xf]
    %v994 = vld [vmem:[%s7 + $0xc4] sm:$0xf]
    %v995 = vld [vmem:[%s7 + $0xc8] sm:$0xf]
    %v996 = vld [vmem:[%s7 + $0xcc] sm:$0xf]
    %v997 = vld [vmem:[%s7 + $0xd0] sm:$0xf]
    %v998 = vld [vmem:[%s7 + $0xd4] sm:$0xf]
    %v999 = vld [vmem:[%s7 + $0xd8] sm:$0xf]
    %v1000 = vld [vmem:[%s7 + $0xdc] sm:$0xf]
    %v1001 = vld [vmem:[%s7 + $0xe0] sm:$0xf]
    %v1002 = vld [vmem:[%s7 + $0xe4] sm:$0xf]
    %v1003 = vld [vmem:[%s7 + $0xe8] sm:$0xf]
    %v1004 = vld [vmem:[%s7 + $0xec] sm:$0xf]
    %v1005 = vld [vmem:[%s7 + $0xf0] sm:$0xf]
    %v1006 = vld [vmem:[%s7 + $0xf4] sm:$0xf]
    %v1007 = vld [vmem:[%s7 + $0xf8] sm:$0xf]
    %v1008 = vld [vmem:[%s7 + $0xfc] sm:$0xf]
    %v1073 = vunpack.c.l.b16 %v945
    %v1074 = vunpack.c.l.b16 %v946
    %v1075 = vunpack.c.l.b16 %v947
    %v1076 = vunpack.c.l.b16 %v948
    %v1077 = vunpack.c.l.b16 %v949
    %v1078 = vunpack.c.l.b16 %v950
    %v1079 = vunpack.c.l.b16 %v951
    %v1080 = vunpack.c.l.b16 %v952
    %v1081 = vunpack.c.l.b16 %v953
    %v1082 = vunpack.c.l.b16 %v954
    %v1083 = vunpack.c.l.b16 %v955
    %v1084 = vunpack.c.l.b16 %v956
    %v1085 = vunpack.c.l.b16 %v957
    %v1086 = vunpack.c.l.b16 %v958
    %v1087 = vunpack.c.l.b16 %v959
    %v1088 = vunpack.c.l.b16 %v960
    %v1089 = vunpack.c.l.b16 %v961
    %v1090 = vunpack.c.l.b16 %v962
    %v1091 = vunpack.c.l.b16 %v963
    %v1092 = vunpack.c.l.b16 %v964
    %v1093 = vunpack.c.l.b16 %v965
    %v1094 = vunpack.c.l.b16 %v966
    %v1095 = vunpack.c.l.b16 %v967
    %v1096 = vunpack.c.l.b16 %v968
    %v1097 = vunpack.c.l.b16 %v969
    %v1098 = vunpack.c.l.b16 %v970
    %v1099 = vunpack.c.l.b16 %v971
    %v1100 = vunpack.c.l.b16 %v972
    %v1101 = vunpack.c.l.b16 %v973
    %v1102 = vunpack.c.l.b16 %v974
    %v1103 = vunpack.c.l.b16 %v975
    %v1104 = vunpack.c.l.b16 %v976
    %v1105 = vunpack.c.l.b16 %v977
    %v1106 = vunpack.c.l.b16 %v978
    %v1107 = vunpack.c.l.b16 %v979
    %v1108 = vunpack.c.l.b16 %v980
    %v1109 = vunpack.c.l.b16 %v981
    %v1110 = vunpack.c.l.b16 %v982
    %v1111 = vunpack.c.l.b16 %v983
    %v1112 = vunpack.c.l.b16 %v984
    %v1113 = vunpack.c.l.b16 %v985
    %v1114 = vunpack.c.l.b16 %v986
    %v1115 = vunpack.c.l.b16 %v987
    %v1116 = vunpack.c.l.b16 %v988
    %v1117 = vunpack.c.l.b16 %v989
    %v1118 = vunpack.c.l.b16 %v990
    %v1119 = vunpack.c.l.b16 %v991
    %v1120 = vunpack.c.l.b16 %v992
    %v1121 = vunpack.c.l.b16 %v993
    %v1122 = vunpack.c.l.b16 %v994
    %v1123 = vunpack.c.l.b16 %v995
    %v1124 = vunpack.c.l.b16 %v996
    %v1125 = vunpack.c.l.b16 %v997
    %v1126 = vunpack.c.l.b16 %v998
    %v1127 = vunpack.c.l.b16 %v999
    %v1128 = vunpack.c.l.b16 %v1000
    %v1129 = vunpack.c.l.b16 %v1001
    %v1130 = vunpack.c.l.b16 %v1002
    %v1131 = vunpack.c.l.b16 %v1003
    %v1132 = vunpack.c.l.b16 %v1004
    %v1133 = vunpack.c.l.b16 %v1005
    %v1134 = vunpack.c.l.b16 %v1006
    %v1135 = vunpack.c.l.b16 %v1007
    %v1136 = vunpack.c.l.b16 %v1008
    %v1137 = vpack.c.b16 %v1074, %v1073
    %v1138 = vpack.c.b16 %v1076, %v1075
    %v1139 = vpack.c.b16 %v1078, %v1077
    %v1140 = vpack.c.b16 %v1080, %v1079
    %v1141 = vpack.c.b16 %v1082, %v1081
    %v1142 = vpack.c.b16 %v1084, %v1083
    %v1143 = vpack.c.b16 %v1086, %v1085
    %v1144 = vpack.c.b16 %v1088, %v1087
    %v1145 = vpack.c.b16 %v1090, %v1089
    %v1146 = vpack.c.b16 %v1092, %v1091
    %v1147 = vpack.c.b16 %v1094, %v1093
    %v1148 = vpack.c.b16 %v1096, %v1095
    %v1149 = vpack.c.b16 %v1098, %v1097
    %v1150 = vpack.c.b16 %v1100, %v1099
    %v1151 = vpack.c.b16 %v1102, %v1101
    %v1152 = vpack.c.b16 %v1104, %v1103
    %v1153 = vpack.c.b16 %v1106, %v1105
    %v1154 = vpack.c.b16 %v1108, %v1107
    %v1155 = vpack.c.b16 %v1110, %v1109
    %v1156 = vpack.c.b16 %v1112, %v1111
    %v1157 = vpack.c.b16 %v1114, %v1113
    %v1158 = vpack.c.b16 %v1116, %v1115
    %v1159 = vpack.c.b16 %v1118, %v1117
    %v1160 = vpack.c.b16 %v1120, %v1119
    %v1161 = vpack.c.b16 %v1122, %v1121
    %v1162 = vpack.c.b16 %v1124, %v1123
    %v1163 = vpack.c.b16 %v1126, %v1125
    %v1164 = vpack.c.b16 %v1128, %v1127
    %v1165 = vpack.c.b16 %v1130, %v1129
    %v1166 = vpack.c.b16 %v1132, %v1131
    %v1167 = vpack.c.b16 %v1134, %v1133
    %v1168 = vpack.c.b16 %v1136, %v1135
    %1201 = vmatprep.subr.bf16.mxu0 0
    %1202 = vmatpush1.bf16.msra.mxu0 %v1137
    %1203 = vmatprep.subr.bf16.mxu0 0
    %1204 = vmatpush1.bf16.msra.mxu0 %v1138
    %1205 = vmatprep.subr.bf16.mxu0 0
    %1206 = vmatpush1.bf16.msra.mxu0 %v1139
    %1207 = vmatprep.subr.bf16.mxu0 0
    %1208 = vmatpush1.bf16.msra.mxu0 %v1140
    %1209 = vmatprep.subr.bf16.mxu0 0
    %1210 = vmatpush1.bf16.msra.mxu0 %v1141
    %1211 = vmatprep.subr.bf16.mxu0 0
    %1212 = vmatpush1.bf16.msra.mxu0 %v1142
    %1213 = vmatprep.subr.bf16.mxu0 0
    %1214 = vmatpush1.bf16.msra.mxu0 %v1143
    %1215 = vmatprep.subr.bf16.mxu0 0
    %1216 = vmatpush1.bf16.msra.mxu0 %v1144
    %1217 = vmatprep.subr.bf16.mxu0 0
    %1218 = vmatpush1.bf16.msra.mxu0 %v1145
    %1219 = vmatprep.subr.bf16.mxu0 0
    %1220 = vmatpush1.bf16.msra.mxu0 %v1146
    %1221 = vmatprep.subr.bf16.mxu0 0
    %1222 = vmatpush1.bf16.msra.mxu0 %v1147
    %1223 = vmatprep.subr.bf16.mxu0 0
    %1224 = vmatpush1.bf16.msra.mxu0 %v1148
    %1225 = vmatprep.subr.bf16.mxu0 0
    %1226 = vmatpush1.bf16.msra.mxu0 %v1149
    %1227 = vmatprep.subr.bf16.mxu0 0
    %1228 = vmatpush1.bf16.msra.mxu0 %v1150
    %1229 = vmatprep.subr.bf16.mxu0 0
    %1230 = vmatpush1.bf16.msra.mxu0 %v1151
    %1231 = vmatprep.subr.bf16.mxu0 0
    %1232 = vmatpush1.bf16.msra.mxu0 %v1152
    %1233 = vmatprep.mubr.bf16.mxu0 %v938
    %1234 = vmatmul.mubr.bf16.gmra.mrb[0].mxu0 %v937
    %v1235 = vpop.f32.mrb[0].mxu0
    %v1236 = vadd.f32 0.0, %v1235
    %v1237 = vpop.f32.mrb[0].mxu0
    %v1238 = vpop.f32.mrb[0].mxu0
    %v1239 = vadd.f32 0.0, %v1238
    %v1240 = vpop.f32.mrb[0].mxu0
    %1241 = vmatprep.mubr.bf16.mxu0 %v942
    %1242 = vmatmul.mubr.bf16.gmra.mrb[0].mxu0 %v941
    %v1243 = vpop.f32.mrb[0].mxu0
    %v1244 = vadd.f32 0.0, %v1243
    %v1245 = vpop.f32.mrb[0].mxu0
    %v1246 = vpop.f32.mrb[0].mxu0
    %v1247 = vadd.f32 0.0, %v1246
    %v1248 = vpop.f32.mrb[0].mxu0
    %1249 = vdwg.mxu0
    %1250 = vmatprep.subr.bf16.mxu0 0
    %1251 = vmatpush1.bf16.msra.mxu0 %v1153
    %1252 = vmatprep.subr.bf16.mxu0 0
    %1253 = vmatpush1.bf16.msra.mxu0 %v1154
    %1254 = vmatprep.subr.bf16.mxu0 0
    %1255 = vmatpush1.bf16.msra.mxu0 %v1155
    %1256 = vmatprep.subr.bf16.mxu0 0
    %1257 = vmatpush1.bf16.msra.mxu0 %v1156
    %1258 = vmatprep.subr.bf16.mxu0 0
    %1259 = vmatpush1.bf16.msra.mxu0 %v1157
    %1260 = vmatprep.subr.bf16.mxu0 0
    %1261 = vmatpush1.bf16.msra.mxu0 %v1158
    %1262 = vmatprep.subr.bf16.mxu0 0
    %1263 = vmatpush1.bf16.msra.mxu0 %v1159
    %1264 = vmatprep.subr.bf16.mxu0 0
    %1265 = vmatpush1.bf16.msra.mxu0 %v1160
    %1266 = vmatprep.subr.bf16.mxu0 0
    %1267 = vmatpush1.bf16.msra.mxu0 %v1161
    %1268 = vmatprep.subr.bf16.mxu0 0
    %1269 = vmatpush1.bf16.msra.mxu0 %v1162
    %1270 = vmatprep.subr.bf16.mxu0 0
    %1271 = vmatpush1.bf16.msra.mxu0 %v1163
    %1272 = vmatprep.subr.bf16.mxu0 0
    %1273 = vmatpush1.bf16.msra.mxu0 %v1164
    %1274 = vmatprep.subr.bf16.mxu0 0
    %1275 = vmatpush1.bf16.msra.mxu0 %v1165
    %1276 = vmatprep.subr.bf16.mxu0 0
    %1277 = vmatpush1.bf16.msra.mxu0 %v1166
    %1278 = vmatprep.subr.bf16.mxu0 0
    %1279 = vmatpush1.bf16.msra.mxu0 %v1167
    %1280 = vmatprep.subr.bf16.mxu0 0
    %1281 = vmatpush1.bf16.msra.mxu0 %v1168
    %1282 = vmatprep.mubr.bf16.mxu0 %v940
    %1283 = vmatmul.mubr.bf16.gmra.mrb[0].mxu0 %v939
    %v1284 = vpop.f32.mrb[0].mxu0
    %v1285 = vadd.f32 %v1236, %v1284
    %v1286 = vpop.f32.mrb[0].mxu0
    %v1287 = vpop.f32.mrb[0].mxu0
    %v1288 = vadd.f32 %v1239, %v1287
    %v1289 = vpop.f32.mrb[0].mxu0
    %1290 = vmatprep.mubr.bf16.mxu0 %v944
    %1291 = vmatmul.mubr.bf16.gmra.mrb[0].mxu0 %v943
    %v1292 = vpop.f32.mrb[0].mxu0
    %v1293 = vadd.f32 %v1244, %v1292
    %v1294 = vpop.f32.mrb[0].mxu0
    %v1295 = vpop.f32.mrb[0].mxu0
    %v1296 = vadd.f32 %v1247, %v1295
    %v1297 = vpop.f32.mrb[0].mxu0
    %1298 = vdwg.mxu0
    %v1299 = vld [vmem:[%s8] sm:$0x1]
    %v1300 = vpack.c.bf16 %v1288, %v1285
    %v1301 = vpack.c.bf16 %v1296, %v1293
    %v1302 = vld [vmem:[%s9] sm:$0x1]
    %v1304 = vlaneseq
    %v1305 = vshrl.u32 %v1304, 7
    %v1306 = vsub.s32 0, %v1305
    %v1307 = vrot.slane %v1302, %v1306
    %vm1309 = vcmask 261120
    %v1311 = vsel %vm1309, %v1299, 0
    %1313 = vmatprep.subr.bf16.mxu0 0
    %1314 = vmatpush1.bf16.msra.mxu0 %v1300
    %1315 = vmatprep.subr.bf16.mxu0 0
    %1316 = vmatpush1.bf16.msra.mxu0 %v1301
    %1317 = vmatprep.subr.bf16.mxu0 0
    %1318 = vmatpush1.bf16.msra.mxu0 0
    %1319 = vmatprep.subr.bf16.mxu0 0
    %1320 = vmatpush1.bf16.msra.mxu0 0
    %1321 = vmatprep.subr.bf16.mxu0 0
    %1322 = vmatpush1.bf16.msra.mxu0 0
    %1323 = vmatprep.subr.bf16.mxu0 0
    %1324 = vmatpush1.bf16.msra.mxu0 0
    %1325 = vmatprep.subr.bf16.mxu0 0
    %1326 = vmatpush1.bf16.msra.mxu0 0
    %1327 = vmatprep.subr.bf16.mxu0 0
    %1328 = vmatpush1.bf16.msra.mxu0 0
    %1329 = vmatprep.subr.bf16.mxu0 0
    %1330 = vmatpush1.bf16.msra.mxu0 0
    %1331 = vmatprep.subr.bf16.mxu0 0
    %1332 = vmatpush1.bf16.msra.mxu0 0
    %1333 = vmatprep.subr.bf16.mxu0 0
    %1334 = vmatpush1.bf16.msra.mxu0 0
    %1335 = vmatprep.subr.bf16.mxu0 0
    %1336 = vmatpush1.bf16.msra.mxu0 0
    %1337 = vmatprep.subr.bf16.mxu0 0
    %1338 = vmatpush1.bf16.msra.mxu0 0
    %1339 = vmatprep.subr.bf16.mxu0 0
    %1340 = vmatpush1.bf16.msra.mxu0 0
    %1341 = vmatprep.subr.bf16.mxu0 0
    %1342 = vmatpush1.bf16.msra.mxu0 0
    %1343 = vmatprep.subr.bf16.mxu0 0
    %1344 = vmatpush1.bf16.msra.mxu0 0
    %1345 = vmatprep.mubr.bf16.mxu0 0
    %1346 = vmatmul.mubr.bf16.gmra.mrb[0].mxu0 %v1311
    %v1347 = vpop.f32.mrb[0].mxu0
    %v1348 = vadd.f32 %v1307, %v1347
    %v1349 = vpop.f32.mrb[0].mxu0
    %v1350 = vpop.f32.mrb[0].mxu0
    %v1351 = vpop.f32.mrb[0].mxu0
    %1352 = vdwg.mxu0
    %vm1353 = vcmask 254976
    %1354 = vst.msk [vmem:[#allocation2] sm:$0x3] %vm1353, %v1348
    // Predicated region
    $region42: #{cnn_forward.1} parent=1 // pred_check
      _
    $region43: #{cnn_forward.1} parent=1 // pred_check_branch
      %1356 = sbr.rel (0) target = $region45
    $region44: #{cnn_forward.1} parent=1 // pred_region
      %s1358 = ssub.s32 32, 32
      %1359 = vsyncadd [#allocation3], %s1358
      %s1361 = sshll.u32 [#allocation2], 4
      %s1362 = int_to_ptr.vmem [resolvable:$true] %s1361
      %1364 = dma.vmem_to_hbm [thread:$0]  %s1362, 32, %s10, [#allocation3]
    $region45: #{cnn_forward.1} parent=1 // pred_fallthru
      _
    // Predicated region
    $region46: #{cnn_forward.1} parent=1 // pred_check
      _
    $region47: #{cnn_forward.1} parent=1 // pred_check_branch
      %1366 = sbr.rel (0) target = $region49
    $region48: #{cnn_forward.1} parent=1 // pred_region
      %1367 = dma.done [#allocation3], 32
    $region49: #{cnn_forward.1} parent=1 // pred_fallthru
      _
    %1368 = vsyncpa [#allocation3], 1

</llo_original>
